<compile_context>
chip_gen: v6e
topology: v6e:2x2x1
jax: 0.10.0
libtpu: 0.0.40
codegen_flags: <defaults>
</compile_context>

<pallas_src>
import jax
import jax.numpy as jnp
from jax.experimental import pallas as pl
from jax.experimental.pallas import tpu as pltpu

LANE = 128
SUBLANE = 8


def _round_up(x, m):
    return (x + m - 1) // m * m


# ----------------------------- Pallas kernel --------------------------------
def _make_seq_kernel(T, TC, BB, Hp, Ap, wdt):
    """Build the fused rollout kernel (closure over static dims)."""
    needs_mask = _round_up(T, TC) != T  # padded time steps present?

    def mm(x, w_ref):
        # MXU dot, f32 accumulation.  With bf16 weights only the (small)
        # activation operand is cast; elementwise math stays f32.
        return jnp.dot(x.astype(wdt), w_ref[...],
                       preferred_element_type=jnp.float32)

    def kernel(obs_ref, inp_ref, h0_ref,
               w_obs_ref, b_obs_ref, w1_ref, b1_ref,
               w_ih_obs_ref, w_ih_x_ref, b_ih_ref,
               w_hh_ref, b_hh_ref, w2_ref, b2_ref,
               q_ref, h_out_ref,
               gx_ref, hseq_ref):
        c = pl.program_id(1)          # time-chunk index (arbitrary axis)

        # ---- phase 1: input-side gates, batched over the whole chunk -------
        obs2 = obs_ref[...].reshape(TC * BB, -1)
        inp2 = inp_ref[...].reshape(TC * BB, -1)
        obs_emb = jnp.maximum(mm(obs2, w_obs_ref) + b_obs_ref[...], 0.0)
        x1 = jnp.maximum(mm(inp2, w1_ref) + b1_ref[...], 0.0)
        gx_ref[...] = (mm(obs_emb, w_ih_obs_ref) + mm(x1, w_ih_x_ref)
                       + b_ih_ref[...])

        # ---- phase 2: sequential GRU recurrence (unrolled over the chunk) --
        @pl.when(c == 0)
        def _():
            h_out_ref[...] = h0_ref[...]   # seed the resident carry block

        h = h_out_ref[...]
        for s in range(TC):                # static -> straight-line code
            gx_s = gx_ref[pl.ds(s * BB, BB), :]
            gh = mm(h, w_hh_ref) + b_hh_ref[...]
            # r and z share one slab-wide sigmoid (lane offsets 0 / Hp).
            rz = jax.nn.sigmoid(gx_s[:, :2 * Hp] + gh[:, :2 * Hp])
            r = rz[:, :Hp]
            z = rz[:, Hp:]
            n = jnp.tanh(gx_s[:, 2 * Hp:] + r * gh[:, 2 * Hp:])
            h_new = (1.0 - z) * n + z * h
            hseq_ref[pl.ds(s * BB, BB), :] = h_new
            if needs_mask:
                # Padded (beyond-T) steps must not advance the carry.
                h = jnp.where(c * TC + s < T, h_new, h)
            else:
                h = h_new
        h_out_ref[...] = h                  # carry across chunks / final h

        # ---- phase 3: deferred readout, batched over the chunk -------------
        q = mm(hseq_ref[...], w2_ref) + b2_ref[...]
        q_ref[...] = q.reshape(TC, BB, Ap).astype(q_ref.dtype)

    return kernel


# ------------------------------- pallas_call ---------------------------------
def _run_seq_kernel(obs_p, inp_p, h0_p, pk, T, TC, BB):
    Tp, Bp, OBSp = obs_p.shape
    INp = inp_p.shape[-1]
    Hp = h0_p.shape[-1]
    Ap = pk["w2"].shape[1]
    NC = Tp // TC
    NB = Bp // BB
    wdt = pk["w_obs"].dtype

    kernel = _make_seq_kernel(T, TC, BB, Hp, Ap, wdt)

    def resident(arr):
        nd = arr.ndim
        # Constant block index -> fetched once, stays resident in VMEM.
        return pl.BlockSpec(arr.shape, lambda b, c, _nd=nd: (0,) * _nd)

    grid_spec = pltpu.PrefetchScalarGridSpec(
        num_scalar_prefetch=0,
        grid=(NB, NC),
        in_specs=[
            pl.BlockSpec((TC, BB, OBSp), lambda b, c: (c, b, 0)),
            pl.BlockSpec((TC, BB, INp), lambda b, c: (c, b, 0)),
            pl.BlockSpec((BB, Hp), lambda b, c: (b, 0)),            # h0
            resident(pk["w_obs"]), resident(pk["b_obs"]),
            resident(pk["w1"]), resident(pk["b1"]),
            resident(pk["w_ih_obs"]), resident(pk["w_ih_x"]),
            resident(pk["b_ih"]),
            resident(pk["w_hh"]), resident(pk["b_hh"]),
            resident(pk["w2"]), resident(pk["b2"]),
        ],
        out_specs=(
            pl.BlockSpec((TC, BB, Ap), lambda b, c: (c, b, 0)),     # q chunk
            pl.BlockSpec((BB, Hp), lambda b, c: (b, 0)),            # final h
        ),
        scratch_shapes=[
            pltpu.VMEM((TC * BB, 3 * Hp), jnp.float32),             # gx chunk
            pltpu.VMEM((TC * BB, Hp), jnp.float32),                 # h chunk
        ],
    )

    return pl.pallas_call(
        kernel,
        out_shape=(
            jax.ShapeDtypeStruct((Tp, Bp, Ap), jnp.float32),
            jax.ShapeDtypeStruct((Bp, Hp), jnp.float32),
        ),
        grid_spec=grid_spec,
        input_output_aliases={2: 1},    # h0 buffer -> final h written in place
        compiler_params=pltpu.CompilerParams(
            dimension_semantics=("parallel", "arbitrary")),
    )(obs_p, inp_p, h0_p,
      pk["w_obs"], pk["b_obs"], pk["w1"], pk["b1"],
      pk["w_ih_obs"], pk["w_ih_x"], pk["b_ih"],
      pk["w_hh"], pk["b_hh"], pk["w2"], pk["b2"])


# ------------------------------- wrappers -------------------------------------
def task_encoder_rnn_agent_rollout(obs_seq, inp_seq, hidden_state, packed,
                                   time_chunk=None, batch_block=None):
    """Run T GRU steps in a single fused pallas_call.

    obs_seq: (T, B, obs_dim), inp_seq: (T, B, input_shape),
    hidden_state: (B, H).  Returns (q_seq (T, B, n_actions), h_final (B, H)).
    batch_block (multiple of 8, divides padded B) shards the batch across the
    leading "parallel" grid axis (v7x megacore); time_chunk amortizes grid
    overhead and sets how many steps are unrolled per grid iteration.
    """
    d = packed["dims"]
    T, B = obs_seq.shape[:2]
    Bp = _round_up(max(B, SUBLANE), SUBLANE)
    BB = batch_block if batch_block is not None else Bp
    assert BB % SUBLANE == 0 and Bp % BB == 0, "batch_block must tile padded B"
    TC = time_chunk if time_chunk is not None else min(T, 8)
    Tp = _round_up(T, TC)

    # TODO(synk): in a real RL loop keep obs/inp/h persistently padded between
    # calls; this per-call pad/astype is the remaining non-kernel overhead.
    obs_p = jnp.pad(obs_seq.astype(jnp.float32),
                    ((0, Tp - T), (0, Bp - B), (0, d["OBSp"] - obs_seq.shape[-1])))
    inp_p = jnp.pad(inp_seq.astype(jnp.float32),
                    ((0, Tp - T), (0, Bp - B), (0, d["INp"] - inp_seq.shape[-1])))
    h0 = hidden_state.reshape(-1, d["H"]).astype(jnp.float32)
    h0_p = jnp.pad(h0, ((0, Bp - B), (0, d["Hp"] - d["H"])))

    q_seq_p, h_p = _run_seq_kernel(obs_p, inp_p, h0_p, packed, T, TC, BB)
    return q_seq_p[:T, :B, :d["A"]], h_p[:B, :d["H"]]


def task_encoder_rnn_agent_forward(observation, inputs, hidden_state, packed):
    """Single-step forward matching TaskEncoderRNNAgent.forward (use_rnn=True)."""
    q_seq, h = task_encoder_rnn_agent_rollout(observation[None], inputs[None],
                                              hidden_state, packed)
    return q_seq[0], h


# ------------------------- parameter init & packing ---------------------------
def init_params(key, obs_dim, input_shape, obs_embedding_dim, hidden_dim,
                n_actions):
    """Logical parameters, pre-transposed to (in_features, out_features)."""
    ks = jax.random.split(key, 10)
    E, H = obs_embedding_dim, hidden_dim
    rnn_dim = E + H

    def lin(kw, kb, fan_in, fan_out):
        bound = 1.0 / jnp.sqrt(fan_in)
        w = jax.random.uniform(kw, (fan_in, fan_out), jnp.float32, -bound, bound)
        b = jax.random.uniform(kb, (1, fan_out), jnp.float32, -bound, bound)
        return w, b

    w_obs, b_obs = lin(ks[0], ks[1], obs_dim, E)
    w1, b1 = lin(ks[2], ks[3], input_shape, H)
    w_ih, b_ih = lin(ks[4], ks[5], rnn_dim, 3 * H)   # GRU input weights [r|z|n]
    w_hh, b_hh = lin(ks[6], ks[7], H, 3 * H)         # GRU hidden weights [r|z|n]
    w2, b2 = lin(ks[8], ks[9], H, n_actions)

    return dict(w_obs=w_obs, b_obs=b_obs, w1=w1, b1=b1,
                w_ih=w_ih, b_ih=b_ih, w_hh=w_hh, b_hh=b_hh,
                w2=w2, b2=b2)


def pack_params(params, obs_dim, input_shape, obs_embedding_dim, hidden_dim,
                n_actions, weight_dtype=jnp.float32):
    """Pad every feature dim to a multiple of 128, split w_ih (no lane concat),
    and optionally store the weight matrices in bf16 (biases stay f32)."""
    E, H, A = obs_embedding_dim, hidden_dim, n_actions
    OBSp = _round_up(obs_dim, LANE)
    INp = _round_up(input_shape, LANE)
    Ep = _round_up(E, LANE)
    Hp = _round_up(H, LANE)
    Ap = _round_up(A, LANE)

    def pad2(w, rows, cols):
        return jnp.pad(w, ((0, rows - w.shape[0]), (0, cols - w.shape[1])))

    def pad_gate_w(w, rows_p):
        # (rows, 3H) -> (rows_p, 3*Hp): pad each [r|z|n] gate separately so the
        # kernel's gate slices land at lane offsets 0 / Hp / 2*Hp.
        return jnp.concatenate(
            [pad2(w[:, g * H:(g + 1) * H], rows_p, Hp) for g in range(3)],
            axis=1)

    def pad_gate_b(b):
        return jnp.concatenate(
            [jnp.pad(b[:, g * H:(g + 1) * H], ((0, 0), (0, Hp - H)))
             for g in range(3)], axis=1)

    wdt = weight_dtype
    w_ih = params["w_ih"]
    packed = dict(
        w_obs=pad2(params["w_obs"], OBSp, Ep).astype(wdt),
        b_obs=jnp.pad(params["b_obs"], ((0, 0), (0, Ep - E))),
        w1=pad2(params["w1"], INp, Hp).astype(wdt),
        b1=jnp.pad(params["b1"], ((0, 0), (0, Hp - H))),
        w_ih_obs=pad_gate_w(w_ih[:E], Ep).astype(wdt),    # rows for obs_embedding
        w_ih_x=pad_gate_w(w_ih[E:], Hp).astype(wdt),      # rows for fc1 output
        b_ih=pad_gate_b(params["b_ih"]),
        w_hh=pad_gate_w(params["w_hh"], Hp).astype(wdt),
        b_hh=pad_gate_b(params["b_hh"]),
        w2=pad2(params["w2"], Hp, Ap).astype(wdt),
        b2=jnp.pad(params["b2"], ((0, 0), (0, Ap - A))),
    )
    packed["dims"] = dict(obs_dim=obs_dim, input_shape=input_shape,
                          E=E, H=H, A=A,
                          OBSp=OBSp, INp=INp, Ep=Ep, Hp=Hp, Ap=Ap)
    return packed


# ------------------------------ pure-JAX reference ---------------------------
def _ref_forward(observation, inputs, hidden_state, params):
    H = params["w_hh"].shape[0]
    obs_emb = jax.nn.relu(observation @ params["w_obs"] + params["b_obs"])
    x1 = jax.nn.relu(inputs @ params["w1"] + params["b1"])
    x = jnp.concatenate([obs_emb, x1], axis=1)
    h_in = hidden_state.reshape(-1, H)
    gx = x @ params["w_ih"] + params["b_ih"]
    gh = h_in @ params["w_hh"] + params["b_hh"]
    r = jax.nn.sigmoid(gx[:, :H] + gh[:, :H])
    z = jax.nn.sigmoid(gx[:, H:2 * H] + gh[:, H:2 * H])
    n = jnp.tanh(gx[:, 2 * H:] + r * gh[:, 2 * H:])
    h = (1.0 - z) * n + z * h_in
    q = h @ params["w2"] + params["b2"]
    return q, h


def _ref_rollout(obs_seq, inp_seq, h0, params):
    def step(h_c, xs):
        o_t, i_t = xs
        q_t, h_next = _ref_forward(o_t, i_t, h_c, params)
        return h_next, q_t
    h_T, q_seq = jax.lax.scan(step, h0, (obs_seq, inp_seq))
    return q_seq, h_T


if __name__ == "__main__":
    # Small shapes consistent with the module.
    B = 8
    obs_dim = 24
    input_shape = 40
    obs_embedding_dim = 32
    hidden_dim = 32
    n_actions = 10
    T = 6

    key = jax.random.PRNGKey(0)
    kp, ko, ki, kos, kis, ko2, ki2 = jax.random.split(key, 7)

    params = init_params(kp, obs_dim, input_shape, obs_embedding_dim,
                         hidden_dim, n_actions)
    packed = pack_params(params, obs_dim, input_shape, obs_embedding_dim,
                         hidden_dim, n_actions)

    observation = jax.random.normal(ko, (B, obs_dim), jnp.float32)
    inputs = jax.random.normal(ki, (B, input_shape), jnp.float32)
    hidden_state = jnp.zeros((B, hidden_dim), jnp.float32)  # init_hidden()

    # ---- single-step forward (matches module.forward) ----
    q, h = task_encoder_rnn_agent_forward(observation, inputs, hidden_state,
                                          packed)
    jax.block_until_ready((q, h))
    q_ref, h_ref = _ref_forward(observation, inputs, hidden_state, params)
    assert jnp.allclose(q, q_ref, atol=1e-5), "single-step q mismatch"
    assert jnp.allclose(h, h_ref, atol=1e-5), "single-step h mismatch"

    # ---- fused T-step rollout (whole sequence in one chunk) ----
    obs_seq = jax.random.normal(kos, (T, B, obs_dim), jnp.float32)
    inp_seq = jax.random.normal(kis, (T, B, input_shape), jnp.float32)
    q_seq, h_T = task_encoder_rnn_agent_rollout(obs_seq, inp_seq, hidden_state,
                                                packed)
    jax.block_until_ready((q_seq, h_T))
    q_seq_ref, h_ref_T = _ref_rollout(obs_seq, inp_seq, hidden_state, params)
    assert jnp.allclose(q_seq, q_seq_ref, atol=5e-4), "rollout q mismatch"
    assert jnp.allclose(h_T, h_ref_T, atol=5e-4), "rollout h mismatch"

    # ---- non-divisible T + batch sharding across the parallel grid axis ----
    B2, T2 = 16, 5
    obs_seq2 = jax.random.normal(ko2, (T2, B2, obs_dim), jnp.float32)
    inp_seq2 = jax.random.normal(ki2, (T2, B2, input_shape), jnp.float32)
    h0_2 = jnp.zeros((B2, hidden_dim), jnp.float32)
    q2, hT2 = task_encoder_rnn_agent_rollout(obs_seq2, inp_seq2, h0_2, packed,
                                             time_chunk=4, batch_block=8)
    jax.block_until_ready((q2, hT2))
    q2_ref, hT2_ref = _ref_rollout(obs_seq2, inp_seq2, h0_2, params)
    assert jnp.allclose(q2, q2_ref, atol=5e-4), "sharded rollout q mismatch"
    assert jnp.allclose(hT2, hT2_ref, atol=5e-4), "sharded rollout h mismatch"

    # ---- bf16 weight path (matmul operands only; gate math stays f32) ----
    packed_bf16 = pack_params(params, obs_dim, input_shape, obs_embedding_dim,
                              hidden_dim, n_actions,
                              weight_dtype=jnp.bfloat16)
    qb, hb = task_encoder_rnn_agent_rollout(obs_seq, inp_seq, hidden_state,
                                            packed_bf16)
    jax.block_until_ready((qb, hb))
    assert jnp.allclose(qb, q_seq_ref, atol=0.1), "bf16 rollout q mismatch"
    assert jnp.allclose(hb, h_ref_T, atol=0.1), "bf16 rollout h mismatch"

    print("KERNEL_OK")
</pallas_src>

<mosaic_0001>
module attributes {stable_mosaic.version = 11 : i64} {
  func.func @kernel(%arg0: i32, %arg1: i32, %arg2: memref<1x8x128xf32, #tpu.memory_space<vmem>>, %arg3: memref<1x8x128xf32, #tpu.memory_space<vmem>>, %arg4: memref<8x128xf32, #tpu.memory_space<vmem>>, %arg5: memref<128x128xf32, #tpu.memory_space<vmem>>, %arg6: memref<1x128xf32, #tpu.memory_space<vmem>>, %arg7: memref<128x128xf32, #tpu.memory_space<vmem>>, %arg8: memref<1x128xf32, #tpu.memory_space<vmem>>, %arg9: memref<128x384xf32, #tpu.memory_space<vmem>>, %arg10: memref<128x384xf32, #tpu.memory_space<vmem>>, %arg11: memref<1x384xf32, #tpu.memory_space<vmem>>, %arg12: memref<128x384xf32, #tpu.memory_space<vmem>>, %arg13: memref<1x384xf32, #tpu.memory_space<vmem>>, %arg14: memref<128x128xf32, #tpu.memory_space<vmem>>, %arg15: memref<1x128xf32, #tpu.memory_space<vmem>>, %arg16: memref<1x8x128xf32, #tpu.memory_space<vmem>>, %arg17: memref<8x128xf32, #tpu.memory_space<vmem>>, %arg18: memref<8x384xf32, #tpu.memory_space<vmem>>, %arg19: memref<8x128xf32, #tpu.memory_space<vmem>>) attributes {dimension_semantics = [#tpu.dimension_semantics<parallel>, #tpu.dimension_semantics<arbitrary>], iteration_bounds = array<i64: 1, 1>, scalar_prefetch = 0 : i64, scratch_operands = 2 : i64, tpu.core_type = #tpu.core_type<tc>, window_params = [{transform_indices = @transform_0, window_bounds = array<i64: 1, 8, 128>}, {transform_indices = @transform_1, window_bounds = array<i64: 1, 8, 128>}, {transform_indices = @transform_2, window_bounds = array<i64: 8, 128>}, {pipeline_mode = #tpu.pipeline_mode<synchronous>, transform_indices = @transform_3, window_bounds = array<i64: 128, 128>}, {pipeline_mode = #tpu.pipeline_mode<synchronous>, transform_indices = @transform_4, window_bounds = array<i64: 1, 128>}, {pipeline_mode = #tpu.pipeline_mode<synchronous>, transform_indices = @transform_5, window_bounds = array<i64: 128, 128>}, {pipeline_mode = #tpu.pipeline_mode<synchronous>, transform_indices = @transform_6, window_bounds = array<i64: 1, 128>}, {pipeline_mode = #tpu.pipeline_mode<synchronous>, transform_indices = @transform_7, window_bounds = array<i64: 128, 384>}, {pipeline_mode = #tpu.pipeline_mode<synchronous>, transform_indices = @transform_8, window_bounds = array<i64: 128, 384>}, {pipeline_mode = #tpu.pipeline_mode<synchronous>, transform_indices = @transform_9, window_bounds = array<i64: 1, 384>}, {pipeline_mode = #tpu.pipeline_mode<synchronous>, transform_indices = @transform_10, window_bounds = array<i64: 128, 384>}, {pipeline_mode = #tpu.pipeline_mode<synchronous>, transform_indices = @transform_11, window_bounds = array<i64: 1, 384>}, {pipeline_mode = #tpu.pipeline_mode<synchronous>, transform_indices = @transform_12, window_bounds = array<i64: 128, 128>}, {pipeline_mode = #tpu.pipeline_mode<synchronous>, transform_indices = @transform_13, window_bounds = array<i64: 1, 128>}, {transform_indices = @transform_14, window_bounds = array<i64: 1, 8, 128>}, {transform_indices = @transform_15, window_bounds = array<i64: 8, 128>}]} {
    %c0 = arith.constant 0 : index
    %c0_0 = arith.constant 0 : index
    %c0_1 = arith.constant 0 : index
    %0 = vector.load %arg2[%c0, %c0_0, %c0_1] : memref<1x8x128xf32, #tpu.memory_space<vmem>>, vector<1x8x128xf32>
    %1 = vector.shape_cast %0 : vector<1x8x128xf32> to vector<8x128xf32>
    %c0_2 = arith.constant 0 : index
    %c0_3 = arith.constant 0 : index
    %c0_4 = arith.constant 0 : index
    %2 = vector.load %arg3[%c0_2, %c0_3, %c0_4] : memref<1x8x128xf32, #tpu.memory_space<vmem>>, vector<1x8x128xf32>
    %3 = vector.shape_cast %2 : vector<1x8x128xf32> to vector<8x128xf32>
    %c0_5 = arith.constant 0 : index
    %c0_6 = arith.constant 0 : index
    %4 = vector.load %arg5[%c0_5, %c0_6] : memref<128x128xf32, #tpu.memory_space<vmem>>, vector<128x128xf32>
    %cst = arith.constant dense<0.000000e+00> : vector<8x128xf32>
    %5 = tpu.matmul %1, %4, %cst {dimension_numbers = #tpu.dot_dimension_numbers<[1], [0], [0], [1], [0, 0, 1, 1], [], []>} : vector<8x128xf32>, vector<128x128xf32>, vector<8x128xf32> -> vector<8x128xf32>
    %c0_7 = arith.constant 0 : index
    %c0_8 = arith.constant 0 : index
    %6 = vector.load %arg6[%c0_7, %c0_8] : memref<1x128xf32, #tpu.memory_space<vmem>>, vector<1x128xf32>
    %7 = vector.broadcast %6 : vector<1x128xf32> to vector<8x128xf32>
    %8 = arith.addf %5, %7 : vector<8x128xf32>
    %cst_9 = arith.constant 0.000000e+00 : f32
    %9 = vector.broadcast %cst_9 : f32 to vector<8x128xf32>
    %10 = arith.maximumf %8, %9 : vector<8x128xf32>
    %c0_10 = arith.constant 0 : index
    %c0_11 = arith.constant 0 : index
    %11 = vector.load %arg7[%c0_10, %c0_11] : memref<128x128xf32, #tpu.memory_space<vmem>>, vector<128x128xf32>
    %cst_12 = arith.constant dense<0.000000e+00> : vector<8x128xf32>
    %12 = tpu.matmul %3, %11, %cst_12 {dimension_numbers = #tpu.dot_dimension_numbers<[1], [0], [0], [1], [0, 0, 1, 1], [], []>} : vector<8x128xf32>, vector<128x128xf32>, vector<8x128xf32> -> vector<8x128xf32>
    %c0_13 = arith.constant 0 : index
    %c0_14 = arith.constant 0 : index
    %13 = vector.load %arg8[%c0_13, %c0_14] : memref<1x128xf32, #tpu.memory_space<vmem>>, vector<1x128xf32>
    %14 = vector.broadcast %13 : vector<1x128xf32> to vector<8x128xf32>
    %15 = arith.addf %12, %14 : vector<8x128xf32>
    %cst_15 = arith.constant 0.000000e+00 : f32
    %16 = vector.broadcast %cst_15 : f32 to vector<8x128xf32>
    %17 = arith.maximumf %15, %16 : vector<8x128xf32>
    %c0_16 = arith.constant 0 : index
    %c0_17 = arith.constant 0 : index
    %18 = vector.load %arg9[%c0_16, %c0_17] : memref<128x384xf32, #tpu.memory_space<vmem>>, vector<128x384xf32>
    %cst_18 = arith.constant dense<0.000000e+00> : vector<8x384xf32>
    %19 = tpu.matmul %10, %18, %cst_18 {dimension_numbers = #tpu.dot_dimension_numbers<[1], [0], [0], [1], [0, 0, 1, 1], [], []>} : vector<8x128xf32>, vector<128x384xf32>, vector<8x384xf32> -> vector<8x384xf32>
    %c0_19 = arith.constant 0 : index
    %c0_20 = arith.constant 0 : index
    %20 = vector.load %arg10[%c0_19, %c0_20] : memref<128x384xf32, #tpu.memory_space<vmem>>, vector<128x384xf32>
    %cst_21 = arith.constant dense<0.000000e+00> : vector<8x384xf32>
    %21 = tpu.matmul %17, %20, %cst_21 {dimension_numbers = #tpu.dot_dimension_numbers<[1], [0], [0], [1], [0, 0, 1, 1], [], []>} : vector<8x128xf32>, vector<128x384xf32>, vector<8x384xf32> -> vector<8x384xf32>
    %22 = arith.addf %19, %21 : vector<8x384xf32>
    %c0_22 = arith.constant 0 : index
    %c0_23 = arith.constant 0 : index
    %23 = vector.load %arg11[%c0_22, %c0_23] : memref<1x384xf32, #tpu.memory_space<vmem>>, vector<1x384xf32>
    %24 = vector.broadcast %23 : vector<1x384xf32> to vector<8x384xf32>
    %25 = arith.addf %22, %24 : vector<8x384xf32>
    %c0_24 = arith.constant 0 : index
    %c0_25 = arith.constant 0 : index
    %26 = vector.load %arg18[%c0_24, %c0_25] : memref<8x384xf32, #tpu.memory_space<vmem>>, vector<8x384xf32>
    tpu.vector_store %arg18[%c0_24, %c0_25], %25 {strides = array<i32>} : memref<8x384xf32, #tpu.memory_space<vmem>>, vector<8x384xf32>,
    %c0_i32 = arith.constant 0 : i32
    %27 = arith.cmpi eq, %arg1, %c0_i32 : i32
    %28 = arith.extui %27 : i1 to i32
    %c0_i32_26 = arith.constant 0 : i32
    %29 = arith.cmpi ne, %28, %c0_i32_26 : i32
    scf.if %29 {
      %c0_52 = arith.constant 0 : index
      %c0_53 = arith.constant 0 : index
      %67 = vector.load %arg4[%c0_52, %c0_53] : memref<8x128xf32, #tpu.memory_space<vmem>>, vector<8x128xf32>
      %c0_54 = arith.constant 0 : index
      %c0_55 = arith.constant 0 : index
      %68 = vector.load %arg17[%c0_54, %c0_55] : memref<8x128xf32, #tpu.memory_space<vmem>>, vector<8x128xf32>
      tpu.vector_store %arg17[%c0_54, %c0_55], %67 {strides = array<i32>} : memref<8x128xf32, #tpu.memory_space<vmem>>, vector<8x128xf32>,
    } else {
    }
    %c0_27 = arith.constant 0 : index
    %c0_28 = arith.constant 0 : index
    %30 = vector.load %arg17[%c0_27, %c0_28] : memref<8x128xf32, #tpu.memory_space<vmem>>, vector<8x128xf32>
    %c0_29 = arith.constant 0 : index
    %c0_30 = arith.constant 0 : index
    %31 = vector.load %arg18[%c0_29, %c0_30] : memref<8x384xf32, #tpu.memory_space<vmem>>, vector<8x384xf32>
    %c0_31 = arith.constant 0 : index
    %c0_32 = arith.constant 0 : index
    %32 = vector.load %arg12[%c0_31, %c0_32] : memref<128x384xf32, #tpu.memory_space<vmem>>, vector<128x384xf32>
    %cst_33 = arith.constant dense<0.000000e+00> : vector<8x384xf32>
    %33 = tpu.matmul %30, %32, %cst_33 {dimension_numbers = #tpu.dot_dimension_numbers<[1], [0], [0], [1], [0, 0, 1, 1], [], []>} : vector<8x128xf32>, vector<128x384xf32>, vector<8x384xf32> -> vector<8x384xf32>
    %c0_34 = arith.constant 0 : index
    %c0_35 = arith.constant 0 : index
    %34 = vector.load %arg13[%c0_34, %c0_35] : memref<1x384xf32, #tpu.memory_space<vmem>>, vector<1x384xf32>
    %35 = vector.broadcast %34 : vector<1x384xf32> to vector<8x384xf32>
    %36 = arith.addf %33, %35 : vector<8x384xf32>
    %37 = vector.extract_strided_slice %31 {offsets = [0, 0], sizes = [8, 256], strides = [1, 1]} : vector<8x384xf32> to vector<8x256xf32>
    %38 = vector.extract_strided_slice %36 {offsets = [0, 0], sizes = [8, 256], strides = [1, 1]} : vector<8x384xf32> to vector<8x256xf32>
    %39 = arith.addf %37, %38 : vector<8x256xf32>
    %40 = arith.negf %39 : vector<8x256xf32>
    %41 = math.exp %40 : vector<8x256xf32>
    %cst_36 = arith.constant 1.000000e+00 : f32
    %42 = vector.broadcast %cst_36 : f32 to vector<8x256xf32>
    %43 = arith.addf %42, %41 : vector<8x256xf32>
    %44 = arith.divf %42, %43 : vector<8x256xf32>
    %45 = vector.extract_strided_slice %44 {offsets = [0, 0], sizes = [8, 128], strides = [1, 1]} : vector<8x256xf32> to vector<8x128xf32>
    %46 = vector.extract_strided_slice %44 {offsets = [0, 128], sizes = [8, 128], strides = [1, 1]} : vector<8x256xf32> to vector<8x128xf32>
    %47 = vector.extract_strided_slice %31 {offsets = [0, 256], sizes = [8, 128], strides = [1, 1]} : vector<8x384xf32> to vector<8x128xf32>
    %48 = vector.extract_strided_slice %36 {offsets = [0, 256], sizes = [8, 128], strides = [1, 1]} : vector<8x384xf32> to vector<8x128xf32>
    %49 = arith.mulf %45, %48 : vector<8x128xf32>
    %50 = arith.addf %47, %49 : vector<8x128xf32>
    %51 = math.tanh %50 : vector<8x128xf32>
    %cst_37 = arith.constant 1.000000e+00 : f32
    %52 = vector.broadcast %cst_37 : f32 to vector<8x128xf32>
    %53 = arith.subf %52, %46 : vector<8x128xf32>
    %54 = arith.mulf %53, %51 : vector<8x128xf32>
    %55 = arith.mulf %46, %30 : vector<8x128xf32>
    %56 = arith.addf %54, %55 : vector<8x128xf32>
    %c0_38 = arith.constant 0 : index
    %c0_39 = arith.constant 0 : index
    %57 = vector.load %arg19[%c0_38, %c0_39] : memref<8x128xf32, #tpu.memory_space<vmem>>, vector<8x128xf32>
    tpu.vector_store %arg19[%c0_38, %c0_39], %56 {strides = array<i32>} : memref<8x128xf32, #tpu.memory_space<vmem>>, vector<8x128xf32>,
    %c0_40 = arith.constant 0 : index
    %c0_41 = arith.constant 0 : index
    %58 = vector.load %arg17[%c0_40, %c0_41] : memref<8x128xf32, #tpu.memory_space<vmem>>, vector<8x128xf32>
    tpu.vector_store %arg17[%c0_40, %c0_41], %56 {strides = array<i32>} : memref<8x128xf32, #tpu.memory_space<vmem>>, vector<8x128xf32>,
    %c0_42 = arith.constant 0 : index
    %c0_43 = arith.constant 0 : index
    %59 = vector.load %arg19[%c0_42, %c0_43] : memref<8x128xf32, #tpu.memory_space<vmem>>, vector<8x128xf32>
    %c0_44 = arith.constant 0 : index
    %c0_45 = arith.constant 0 : index
    %60 = vector.load %arg14[%c0_44, %c0_45] : memref<128x128xf32, #tpu.memory_space<vmem>>, vector<128x128xf32>
    %cst_46 = arith.constant dense<0.000000e+00> : vector<8x128xf32>
    %61 = tpu.matmul %59, %60, %cst_46 {dimension_numbers = #tpu.dot_dimension_numbers<[1], [0], [0], [1], [0, 0, 1, 1], [], []>} : vector<8x128xf32>, vector<128x128xf32>, vector<8x128xf32> -> vector<8x128xf32>
    %c0_47 = arith.constant 0 : index
    %c0_48 = arith.constant 0 : index
    %62 = vector.load %arg15[%c0_47, %c0_48] : memref<1x128xf32, #tpu.memory_space<vmem>>, vector<1x128xf32>
    %63 = vector.broadcast %62 : vector<1x128xf32> to vector<8x128xf32>
    %64 = arith.addf %61, %63 : vector<8x128xf32>
    %65 = vector.shape_cast %64 : vector<8x128xf32> to vector<1x8x128xf32>
    %c0_49 = arith.constant 0 : index
    %c0_50 = arith.constant 0 : index
    %c0_51 = arith.constant 0 : index
    %66 = vector.load %arg16[%c0_49, %c0_50, %c0_51] : memref<1x8x128xf32, #tpu.memory_space<vmem>>, vector<1x8x128xf32>
    tpu.vector_store %arg16[%c0_49, %c0_50, %c0_51], %65 {strides = array<i32>} : memref<1x8x128xf32, #tpu.memory_space<vmem>>, vector<1x8x128xf32>,
    return
  }
  func.func @transform_0(%arg0: i32, %arg1: i32) -> (i32, i32, i32) {
    %c0_i32 = arith.constant 0 : i32
    %c0_i32_0 = arith.constant 0 : i32
    return %arg1, %arg0, %c0_i32 : i32, i32, i32
  }
  func.func @transform_1(%arg0: i32, %arg1: i32) -> (i32, i32, i32) {
    %c0_i32 = arith.constant 0 : i32
    %c0_i32_0 = arith.constant 0 : i32
    return %arg1, %arg0, %c0_i32 : i32, i32, i32
  }
  func.func @transform_2(%arg0: i32, %arg1: i32) -> (i32, i32) {
    %c0_i32 = arith.constant 0 : i32
    %c0_i32_0 = arith.constant 0 : i32
    return %arg0, %c0_i32 : i32, i32
  }
  func.func @transform_3(%arg0: i32, %arg1: i32) -> (i32, i32) {
    %c0_i32 = arith.constant 0 : i32
    %c0_i32_0 = arith.constant 0 : i32
    %c0_i32_1 = arith.constant 0 : i32
    return %c0_i32, %c0_i32_0 : i32, i32
  }
  func.func @transform_4(%arg0: i32, %arg1: i32) -> (i32, i32) {
    %c0_i32 = arith.constant 0 : i32
    %c0_i32_0 = arith.constant 0 : i32
    %c0_i32_1 = arith.constant 0 : i32
    return %c0_i32, %c0_i32_0 : i32, i32
  }
  func.func @transform_5(%arg0: i32, %arg1: i32) -> (i32, i32) {
    %c0_i32 = arith.constant 0 : i32
    %c0_i32_0 = arith.constant 0 : i32
    %c0_i32_1 = arith.constant 0 : i32
    return %c0_i32, %c0_i32_0 : i32, i32
  }
  func.func @transform_6(%arg0: i32, %arg1: i32) -> (i32, i32) {
    %c0_i32 = arith.constant 0 : i32
    %c0_i32_0 = arith.constant 0 : i32
    %c0_i32_1 = arith.constant 0 : i32
    return %c0_i32, %c0_i32_0 : i32, i32
  }
  func.func @transform_7(%arg0: i32, %arg1: i32) -> (i32, i32) {
    %c0_i32 = arith.constant 0 : i32
    %c0_i32_0 = arith.constant 0 : i32
    %c0_i32_1 = arith.constant 0 : i32
    return %c0_i32, %c0_i32_0 : i32, i32
  }
  func.func @transform_8(%arg0: i32, %arg1: i32) -> (i32, i32) {
    %c0_i32 = arith.constant 0 : i32
    %c0_i32_0 = arith.constant 0 : i32
    %c0_i32_1 = arith.constant 0 : i32
    return %c0_i32, %c0_i32_0 : i32, i32
  }
  func.func @transform_9(%arg0: i32, %arg1: i32) -> (i32, i32) {
    %c0_i32 = arith.constant 0 : i32
    %c0_i32_0 = arith.constant 0 : i32
    %c0_i32_1 = arith.constant 0 : i32
    return %c0_i32, %c0_i32_0 : i32, i32
  }
  func.func @transform_10(%arg0: i32, %arg1: i32) -> (i32, i32) {
    %c0_i32 = arith.constant 0 : i32
    %c0_i32_0 = arith.constant 0 : i32
    %c0_i32_1 = arith.constant 0 : i32
    return %c0_i32, %c0_i32_0 : i32, i32
  }
  func.func @transform_11(%arg0: i32, %arg1: i32) -> (i32, i32) {
    %c0_i32 = arith.constant 0 : i32
    %c0_i32_0 = arith.constant 0 : i32
    %c0_i32_1 = arith.constant 0 : i32
    return %c0_i32, %c0_i32_0 : i32, i32
  }
  func.func @transform_12(%arg0: i32, %arg1: i32) -> (i32, i32) {
    %c0_i32 = arith.constant 0 : i32
    %c0_i32_0 = arith.constant 0 : i32
    %c0_i32_1 = arith.constant 0 : i32
    return %c0_i32, %c0_i32_0 : i32, i32
  }
  func.func @transform_13(%arg0: i32, %arg1: i32) -> (i32, i32) {
    %c0_i32 = arith.constant 0 : i32
    %c0_i32_0 = arith.constant 0 : i32
    %c0_i32_1 = arith.constant 0 : i32
    return %c0_i32, %c0_i32_0 : i32, i32
  }
  func.func @transform_14(%arg0: i32, %arg1: i32) -> (i32, i32, i32) {
    %c0_i32 = arith.constant 0 : i32
    %c0_i32_0 = arith.constant 0 : i32
    return %arg1, %arg0, %c0_i32 : i32, i32, i32
  }
  func.func @transform_15(%arg0: i32, %arg1: i32) -> (i32, i32) {
    %c0_i32 = arith.constant 0 : i32
    %c0_i32_0 = arith.constant 0 : i32
    return %arg0, %c0_i32 : i32, i32
  }
}

</mosaic_0001>

<llo_original>
// kernel: tpu_custom_call.1
$region0: #{tpu_custom_call.1}
  #allocation0 [shape = 'u32[]', space=smem, size = 0x4, offset = 0x4, fixed_abs, tag = 'smem constant byte address 0x4 - core index']
  #allocation1 [shape = 'u32[144,128]{1,0:T(1,128)}', space=vmem, size = 0x12000, scoped, tag = 'internal scratch']
  #allocation2 [shape = 'f32[8,384]{1,0:T(8,128)}', space=vmem, size = 0x3000, scoped, tag = 'scratch operand']
  #allocation3 [shape = 'f32[8,128]{1,0:T(8,128)}', space=vmem, size = 0x1000, scoped, tag = 'scratch operand']
  %s0 = inlined_call_operand.vmem [shape: f32[1,8,128], index: 0, kind: input, shape index: {}]
  %s1 = inlined_call_operand.vmem [shape: f32[1,8,128], index: 1, kind: input, shape index: {}]
  %s2 = inlined_call_operand.hbm [shape: f32[8,128], index: 2, kind: input, shape index: {}, may-alias: {2,15}]
  %s3 = inlined_call_operand.hbm [shape: f32[128,128], index: 3, kind: input, shape index: {}]
  %s4 = inlined_call_operand.vmem [shape: f32[1,128], index: 4, kind: input, shape index: {}]
  %s5 = inlined_call_operand.hbm [shape: f32[128,128], index: 5, kind: input, shape index: {}]
  %s6 = inlined_call_operand.vmem [shape: f32[1,128], index: 6, kind: input, shape index: {}]
  %s7 = inlined_call_operand.hbm [shape: f32[128,384], index: 7, kind: input, shape index: {}]
  %s8 = inlined_call_operand.hbm [shape: f32[128,384], index: 8, kind: input, shape index: {}]
  %s9 = inlined_call_operand.vmem [shape: f32[1,384], index: 9, kind: input, shape index: {}]
  %s10 = inlined_call_operand.hbm [shape: f32[128,384], index: 10, kind: input, shape index: {}]
  %s11 = inlined_call_operand.hbm [shape: f32[1,384], index: 11, kind: input, shape index: {}]
  %s12 = inlined_call_operand.hbm [shape: f32[128,128], index: 12, kind: input, shape index: {}]
  %s13 = inlined_call_operand.hbm [shape: f32[1,128], index: 13, kind: input, shape index: {}]
  %s14 = inlined_call_operand.hbm [shape: f32[1,8,128], index: 14, kind: output, shape index: {0}]
  %s15 = inlined_call_operand.hbm [shape: f32[8,128], index: 15, kind: output, shape index: {1}, may-alias: {2,15}]
  %16 = xla_tuple %s14, %s15
  %s17 = sld [smem:[#allocation0]]
  $region114: #{tpu_custom_call.1} parent=0
    _
  %s19 = ssub.s32 1, %s17
  %s20 = scalar_select 0, %s19, %s17
  $region1: #{tpu_custom_call.1} parent=0
    #allocation4 [shape = 'u8[4096]{0}', space=vmem, size = 0x1000, scoped, tag = 'input window, operand 2, single buffered']
    #allocation5 [shape = 's32[1]{0}', space=sflag, size = 0x4, scoped, tag = 'scoped memory for tpu_custom_call.1']
    #allocation6 [shape = 's32[1]{0}', space=sflag, size = 0x4, scoped, tag = 'scoped memory for tpu_custom_call.1']
    #allocation7 [shape = 'u8[65536]{0}', space=vmem, size = 0x10000, scoped, tag = 'input window, operand 3, single buffered']
    #allocation8 [shape = 's32[1]{0}', space=sflag, size = 0x4, scoped, tag = 'scoped memory for tpu_custom_call.1']
    #allocation9 [shape = 'u8[65536]{0}', space=vmem, size = 0x10000, scoped, tag = 'input window, operand 5, single buffered']
    #allocation10 [shape = 'u8[196608]{0}', space=vmem, size = 0x30000, scoped, tag = 'input window, operand 7, single buffered']
    #allocation11 [shape = 's32[1]{0}', space=sflag, size = 0x4, scoped, tag = 'scoped memory for tpu_custom_call.1']
    #allocation12 [shape = 'u8[196608]{0}', space=vmem, size = 0x30000, scoped, tag = 'input window, operand 8, single buffered']
    #allocation13 [shape = 'u8[196608]{0}', space=vmem, size = 0x30000, scoped, tag = 'input window, operand 10, single buffered']
    #allocation14 [shape = 's32[1]{0}', space=sflag, size = 0x4, scoped, tag = 'scoped memory for tpu_custom_call.1']
    #allocation15 [shape = 'u8[1536]{0}', space=vmem, size = 0x800, scoped, tag = 'input window, operand 11, single buffered']
    #allocation16 [shape = 'u8[65536]{0}', space=vmem, size = 0x10000, scoped, tag = 'input window, operand 12, single buffered']
    #allocation17 [shape = 's32[1]{0}', space=sflag, size = 0x4, scoped, tag = 'scoped memory for tpu_custom_call.1']
    #allocation18 [shape = 'u8[512]{0}', space=vmem, size = 0x400, scoped, tag = 'input window, operand 13, single buffered']
    #allocation19 [shape = 'u8[4096]{0}', space=vmem, size = 0x1000, scoped, tag = 'output window, operand 0, single buffered']
    #allocation20 [shape = 'u8[4096]{0}', space=vmem, size = 0x1000, scoped, tag = 'output window, operand 1, single buffered']
    #allocation21 [shape = 's32[1]{0}', space=sflag, size = 0x4, scoped, tag = 'scoped memory for tpu_custom_call.1']
    %21 = vsyncpa [#allocation5], 0
    %22 = vsyncpa [#allocation8], 0
    %23 = vsyncpa [#allocation11], 0
    %24 = vsyncpa [#allocation14], 0
    %25 = vsyncpa [#allocation17], 0
    %26 = vsyncpa [#allocation6], 0
    %27 = vsyncpa [#allocation21], 0
    // Predicated region
    $region2: #{tpu_custom_call.1} parent=1 // pred_check
      _
    $region3: #{tpu_custom_call.1} parent=1 // pred_check_branch
      %29 = sbr.rel (0) target = $region5
    $region4: #{tpu_custom_call.1} parent=1 // pred_region
      _
    $region5: #{tpu_custom_call.1} parent=1 // pred_fallthru
      _
    // Predicated region
    $region6: #{tpu_custom_call.1} parent=1 // pred_check
      _
    $region7: #{tpu_custom_call.1} parent=1 // pred_check_branch
      %31 = sbr.rel (0) target = $region9
    $region8: #{tpu_custom_call.1} parent=1 // pred_region
      _
    $region9: #{tpu_custom_call.1} parent=1 // pred_fallthru
      _
    // Predicated region
    $region10: #{tpu_custom_call.1} parent=1 // pred_check
      _
    $region11: #{tpu_custom_call.1} parent=1 // pred_check_branch
      %33 = sbr.rel (0) target = $region13
    $region12: #{tpu_custom_call.1} parent=1 // pred_region
      %s35 = ssub.s32 128, 128
      %36 = vsyncadd [#allocation5], %s35
      %s38 = sshll.u32 [#allocation4], 4
      %s39 = int_to_ptr.vmem [resolvable:$true] %s38
      %41 = dma.hbm_to_vmem [thread:$0]  %s2, 128, %s39, [#allocation5]
    $region13: #{tpu_custom_call.1} parent=1 // pred_fallthru
      _
    // Predicated region
    $region14: #{tpu_custom_call.1} parent=1 // pred_check
      _
    $region15: #{tpu_custom_call.1} parent=1 // pred_check_branch
      %43 = sbr.rel (0) target = $region17
    $region16: #{tpu_custom_call.1} parent=1 // pred_region
      %s45 = ssub.s32 2048, 2048
      %46 = vsyncadd [#allocation8], %s45
      %s47 = sshll.u32 [#allocation7], 4
      %s48 = int_to_ptr.vmem [resolvable:$true] %s47
      %53 = dma.hbm_to_vmem [thread:$0]  %s3, 2048, %s48, [#allocation8], 128, 128, 8
    $region17: #{tpu_custom_call.1} parent=1 // pred_fallthru
      _
    // Predicated region
    $region18: #{tpu_custom_call.1} parent=1 // pred_check
      _
    $region19: #{tpu_custom_call.1} parent=1 // pred_check_branch
      %55 = sbr.rel (0) target = $region21
    $region20: #{tpu_custom_call.1} parent=1 // pred_region
      _
    $region21: #{tpu_custom_call.1} parent=1 // pred_fallthru
      _
    // Predicated region
    $region22: #{tpu_custom_call.1} parent=1 // pred_check
      _
    $region23: #{tpu_custom_call.1} parent=1 // pred_check_branch
      %57 = sbr.rel (0) target = $region25
    $region24: #{tpu_custom_call.1} parent=1 // pred_region
      %s59 = ssub.s32 2048, 2048
      %60 = vsyncadd [#allocation8], %s59
      %s61 = sshll.u32 [#allocation9], 4
      %s62 = int_to_ptr.vmem [resolvable:$true] %s61
      %67 = dma.hbm_to_vmem [thread:$0]  %s5, 2048, %s62, [#allocation8], 128, 128, 8
    $region25: #{tpu_custom_call.1} parent=1 // pred_fallthru
      _
    // Predicated region
    $region26: #{tpu_custom_call.1} parent=1 // pred_check
      _
    $region27: #{tpu_custom_call.1} parent=1 // pred_check_branch
      %69 = sbr.rel (0) target = $region29
    $region28: #{tpu_custom_call.1} parent=1 // pred_region
      _
    $region29: #{tpu_custom_call.1} parent=1 // pred_fallthru
      _
    // Predicated region
    $region30: #{tpu_custom_call.1} parent=1 // pred_check
      _
    $region31: #{tpu_custom_call.1} parent=1 // pred_check_branch
      %71 = sbr.rel (0) target = $region33
    $region32: #{tpu_custom_call.1} parent=1 // pred_region
      %s73 = ssub.s32 6144, 6144
      %74 = vsyncadd [#allocation11], %s73
      %s75 = sshll.u32 [#allocation10], 4
      %s76 = int_to_ptr.vmem [resolvable:$true] %s75
      %81 = dma.hbm_to_vmem [thread:$0]  %s7, 6144, %s76, [#allocation11], 384, 384, 24
    $region33: #{tpu_custom_call.1} parent=1 // pred_fallthru
      _
    // Predicated region
    $region34: #{tpu_custom_call.1} parent=1 // pred_check
      _
    $region35: #{tpu_custom_call.1} parent=1 // pred_check_branch
      %83 = sbr.rel (0) target = $region37
    $region36: #{tpu_custom_call.1} parent=1 // pred_region
      %s85 = ssub.s32 6144, 6144
      %86 = vsyncadd [#allocation11], %s85
      %s87 = sshll.u32 [#allocation12], 4
      %s88 = int_to_ptr.vmem [resolvable:$true] %s87
      %93 = dma.hbm_to_vmem [thread:$0]  %s8, 6144, %s88, [#allocation11], 384, 384, 24
    $region37: #{tpu_custom_call.1} parent=1 // pred_fallthru
      _
    // Predicated region
    $region38: #{tpu_custom_call.1} parent=1 // pred_check
      _
    $region39: #{tpu_custom_call.1} parent=1 // pred_check_branch
      %95 = sbr.rel (0) target = $region41
    $region40: #{tpu_custom_call.1} parent=1 // pred_region
      _
    $region41: #{tpu_custom_call.1} parent=1 // pred_fallthru
      _
    // Predicated region
    $region42: #{tpu_custom_call.1} parent=1 // pred_check
      _
    $region43: #{tpu_custom_call.1} parent=1 // pred_check_branch
      %97 = sbr.rel (0) target = $region45
    $region44: #{tpu_custom_call.1} parent=1 // pred_region
      %s99 = ssub.s32 6144, 6144
      %100 = vsyncadd [#allocation14], %s99
      %s101 = sshll.u32 [#allocation13], 4
      %s102 = int_to_ptr.vmem [resolvable:$true] %s101
      %107 = dma.hbm_to_vmem [thread:$0]  %s10, 6144, %s102, [#allocation14], 384, 384, 24
    $region45: #{tpu_custom_call.1} parent=1 // pred_fallthru
      _
    // Predicated region
    $region46: #{tpu_custom_call.1} parent=1 // pred_check
      _
    $region47: #{tpu_custom_call.1} parent=1 // pred_check_branch
      %109 = sbr.rel (0) target = $region49
    $region48: #{tpu_custom_call.1} parent=1 // pred_region
      %s111 = ssub.s32 48, 48
      %112 = vsyncadd [#allocation14], %s111
      %s114 = sshll.u32 [#allocation15], 4
      %s115 = int_to_ptr.vmem [resolvable:$true] %s114
      %117 = dma.hbm_to_vmem [thread:$0]  %s11, 48, %s115, [#allocation14]
    $region49: #{tpu_custom_call.1} parent=1 // pred_fallthru
      _
    // Predicated region
    $region50: #{tpu_custom_call.1} parent=1 // pred_check
      _
    $region51: #{tpu_custom_call.1} parent=1 // pred_check_branch
      %119 = sbr.rel (0) target = $region53
    $region52: #{tpu_custom_call.1} parent=1 // pred_region
      %s121 = ssub.s32 2048, 2048
      %122 = vsyncadd [#allocation17], %s121
      %s123 = sshll.u32 [#allocation16], 4
      %s124 = int_to_ptr.vmem [resolvable:$true] %s123
      %129 = dma.hbm_to_vmem [thread:$0]  %s12, 2048, %s124, [#allocation17], 128, 128, 8
    $region53: #{tpu_custom_call.1} parent=1 // pred_fallthru
      _
    // Predicated region
    $region54: #{tpu_custom_call.1} parent=1 // pred_check
      _
    $region55: #{tpu_custom_call.1} parent=1 // pred_check_branch
      %131 = sbr.rel (0) target = $region57
    $region56: #{tpu_custom_call.1} parent=1 // pred_region
      %s133 = ssub.s32 16, 16
      %134 = vsyncadd [#allocation17], %s133
      %s136 = sshll.u32 [#allocation18], 4
      %s137 = int_to_ptr.vmem [resolvable:$true] %s136
      %139 = dma.hbm_to_vmem [thread:$0]  %s13, 16, %s137, [#allocation17]
    $region57: #{tpu_custom_call.1} parent=1 // pred_fallthru
      _
    // Predicated region
    $region58: #{tpu_custom_call.1} parent=1 // pred_check
      _
    $region59: #{tpu_custom_call.1} parent=1 // pred_check_branch
      %141 = sbr.rel (0) target = $region61
    $region60: #{tpu_custom_call.1} parent=1 // pred_region
      %142 = dma.done [#allocation5], 128
    $region61: #{tpu_custom_call.1} parent=1 // pred_fallthru
      _
    // Predicated region
    $region62: #{tpu_custom_call.1} parent=1 // pred_check
      _
    $region63: #{tpu_custom_call.1} parent=1 // pred_check_branch
      %144 = sbr.rel (0) target = $region65
    $region64: #{tpu_custom_call.1} parent=1 // pred_region
      %145 = dma.done [#allocation8], 2048
    $region65: #{tpu_custom_call.1} parent=1 // pred_fallthru
      _
    // Predicated region
    $region66: #{tpu_custom_call.1} parent=1 // pred_check
      _
    $region67: #{tpu_custom_call.1} parent=1 // pred_check_branch
      %147 = sbr.rel (0) target = $region69
    $region68: #{tpu_custom_call.1} parent=1 // pred_region
      %148 = dma.done [#allocation8], 2048
    $region69: #{tpu_custom_call.1} parent=1 // pred_fallthru
      _
    // Predicated region
    $region70: #{tpu_custom_call.1} parent=1 // pred_check
      _
    $region71: #{tpu_custom_call.1} parent=1 // pred_check_branch
      %150 = sbr.rel (0) target = $region73
    $region72: #{tpu_custom_call.1} parent=1 // pred_region
      %151 = dma.done [#allocation11], 6144
    $region73: #{tpu_custom_call.1} parent=1 // pred_fallthru
      _
    // Predicated region
    $region74: #{tpu_custom_call.1} parent=1 // pred_check
      _
    $region75: #{tpu_custom_call.1} parent=1 // pred_check_branch
      %153 = sbr.rel (0) target = $region77
    $region76: #{tpu_custom_call.1} parent=1 // pred_region
      %154 = dma.done [#allocation11], 6144
    $region77: #{tpu_custom_call.1} parent=1 // pred_fallthru
      _
    // Predicated region
    $region78: #{tpu_custom_call.1} parent=1 // pred_check
      _
    $region79: #{tpu_custom_call.1} parent=1 // pred_check_branch
      %156 = sbr.rel (0) target = $region81
    $region80: #{tpu_custom_call.1} parent=1 // pred_region
      %157 = dma.done [#allocation14], 6144
    $region81: #{tpu_custom_call.1} parent=1 // pred_fallthru
      _
    // Predicated region
    $region82: #{tpu_custom_call.1} parent=1 // pred_check
      _
    $region83: #{tpu_custom_call.1} parent=1 // pred_check_branch
      %159 = sbr.rel (0) target = $region85
    $region84: #{tpu_custom_call.1} parent=1 // pred_region
      %160 = dma.done [#allocation14], 48
    $region85: #{tpu_custom_call.1} parent=1 // pred_fallthru
      _
    // Predicated region
    $region86: #{tpu_custom_call.1} parent=1 // pred_check
      _
    $region87: #{tpu_custom_call.1} parent=1 // pred_check_branch
      %162 = sbr.rel (0) target = $region89
    $region88: #{tpu_custom_call.1} parent=1 // pred_region
      %163 = dma.done [#allocation17], 2048
    $region89: #{tpu_custom_call.1} parent=1 // pred_fallthru
      _
    // Predicated region
    $region90: #{tpu_custom_call.1} parent=1 // pred_check
      _
    $region91: #{tpu_custom_call.1} parent=1 // pred_check_branch
      %165 = sbr.rel (0) target = $region93
    $region92: #{tpu_custom_call.1} parent=1 // pred_region
      %166 = dma.done [#allocation17], 16
    $region93: #{tpu_custom_call.1} parent=1 // pred_fallthru
      _
    %v167 = vld [vmem:[%s0] sm:$0xff]
    %v168 = vld [vmem:[%s1] sm:$0xff]
    %v169 = vld [vmem:[#allocation7] sm:$0xff]
    %v170 = vld [vmem:[#allocation7 + $0x8] sm:$0xff]
    %v171 = vld [vmem:[#allocation7 + $0x10] sm:$0xff]
    %v172 = vld [vmem:[#allocation7 + $0x18] sm:$0xff]
    %v173 = vld [vmem:[#allocation7 + $0x20] sm:$0xff]
    %v174 = vld [vmem:[#allocation7 + $0x28] sm:$0xff]
    %v175 = vld [vmem:[#allocation7 + $0x30] sm:$0xff]
    %v176 = vld [vmem:[#allocation7 + $0x38] sm:$0xff]
    %v177 = vld [vmem:[#allocation7 + $0x40] sm:$0xff]
    %v178 = vld [vmem:[#allocation7 + $0x48] sm:$0xff]
    %v179 = vld [vmem:[#allocation7 + $0x50] sm:$0xff]
    %v180 = vld [vmem:[#allocation7 + $0x58] sm:$0xff]
    %v181 = vld [vmem:[#allocation7 + $0x60] sm:$0xff]
    %v182 = vld [vmem:[#allocation7 + $0x68] sm:$0xff]
    %v183 = vld [vmem:[#allocation7 + $0x70] sm:$0xff]
    %v184 = vld [vmem:[#allocation7 + $0x78] sm:$0xff]
    %v185 = vld [vmem:[%s4] sm:$0x1]
    %v187 = vlaneseq
    %v188 = vshrl.u32 %v187, 7
    %v189 = vsub.s32 0, %v188
    %v190 = vrot.slane %v185, %v189
    %192 = vmatprep.subr.mxu0 0.0
    %193 = vmatpush1.msra.mxu0 %v184
    %194 = vmatprep.subr.mxu0 0.0
    %195 = vmatpush1.msra.mxu0 %v183
    %196 = vmatprep.subr.mxu0 0.0
    %197 = vmatpush1.msra.mxu0 %v182
    %198 = vmatprep.subr.mxu0 0.0
    %199 = vmatpush1.msra.mxu0 %v181
    %200 = vmatprep.subr.mxu0 0.0
    %201 = vmatpush1.msra.mxu0 %v180
    %202 = vmatprep.subr.mxu0 0.0
    %203 = vmatpush1.msra.mxu0 %v179
    %204 = vmatprep.subr.mxu0 0.0
    %205 = vmatpush1.msra.mxu0 %v178
    %206 = vmatprep.subr.mxu0 0.0
    %207 = vmatpush1.msra.mxu0 %v177
    %208 = vmatprep.subr.mxu0 0.0
    %209 = vmatpush1.msra.mxu0 %v176
    %210 = vmatprep.subr.mxu0 0.0
    %211 = vmatpush1.msra.mxu0 %v175
    %212 = vmatprep.subr.mxu0 0.0
    %213 = vmatpush1.msra.mxu0 %v174
    %214 = vmatprep.subr.mxu0 0.0
    %215 = vmatpush1.msra.mxu0 %v173
    %216 = vmatprep.subr.mxu0 0.0
    %217 = vmatpush1.msra.mxu0 %v172
    %218 = vmatprep.subr.mxu0 0.0
    %219 = vmatpush1.msra.mxu0 %v171
    %220 = vmatprep.subr.mxu0 0.0
    %221 = vmatpush1.msra.mxu0 %v170
    %222 = vmatprep.subr.mxu0 0.0
    %223 = vmatpush1.msra.mxu0 %v169
    %224 = vmatprep.subr.mxu0 0.0
    %225 = vmatpush2.msra.mxu0 0.0
    %226 = vmatprep.subr.mxu0 0.0
    %227 = vmatpush2.msra.mxu0 0.0
    %228 = vmatprep.subr.mxu0 0.0
    %229 = vmatpush2.msra.mxu0 0.0
    %230 = vmatprep.subr.mxu0 0.0
    %231 = vmatpush2.msra.mxu0 0.0
    %232 = vmatprep.subr.mxu0 0.0
    %233 = vmatpush2.msra.mxu0 0.0
    %234 = vmatprep.subr.mxu0 0.0
    %235 = vmatpush2.msra.mxu0 0.0
    %236 = vmatprep.subr.mxu0 0.0
    %237 = vmatpush2.msra.mxu0 0.0
    %238 = vmatprep.subr.mxu0 0.0
    %239 = vmatpush2.msra.mxu0 0.0
    %240 = vmatprep.subr.mxu0 0.0
    %241 = vmatpush2.msra.mxu0 0.0
    %242 = vmatprep.subr.mxu0 0.0
    %243 = vmatpush2.msra.mxu0 0.0
    %244 = vmatprep.subr.mxu0 0.0
    %245 = vmatpush2.msra.mxu0 0.0
    %246 = vmatprep.subr.mxu0 0.0
    %247 = vmatpush2.msra.mxu0 0.0
    %248 = vmatprep.subr.mxu0 0.0
    %249 = vmatpush2.msra.mxu0 0.0
    %250 = vmatprep.subr.mxu0 0.0
    %251 = vmatpush2.msra.mxu0 0.0
    %252 = vmatprep.subr.mxu0 0.0
    %253 = vmatpush2.msra.mxu0 0.0
    %254 = vmatprep.subr.mxu0 0.0
    %255 = vmatpush2.msra.mxu0 0.0
    %256 = vmatprep.mubr.f32.mxu0 0.0
    %257 = vmatmul.mubr.f32.gmra.mxu0 %v167
    %v258 = vpop.f32.mrf.mxu0
    %v259 = vadd.f32 %v190, %v258
    %v260 = vpop.f32.mrf.mxu0
    %261 = vdwg.mxu0
    %v262 = vmax.f32 %v259, 0.0
    %v263 = vld [vmem:[#allocation9] sm:$0xff]
    %v264 = vld [vmem:[#allocation9 + $0x8] sm:$0xff]
    %v265 = vld [vmem:[#allocation9 + $0x10] sm:$0xff]
    %v266 = vld [vmem:[#allocation9 + $0x18] sm:$0xff]
    %v267 = vld [vmem:[#allocation9 + $0x20] sm:$0xff]
    %v268 = vld [vmem:[#allocation9 + $0x28] sm:$0xff]
    %v269 = vld [vmem:[#allocation9 + $0x30] sm:$0xff]
    %v270 = vld [vmem:[#allocation9 + $0x38] sm:$0xff]
    %v271 = vld [vmem:[#allocation9 + $0x40] sm:$0xff]
    %v272 = vld [vmem:[#allocation9 + $0x48] sm:$0xff]
    %v273 = vld [vmem:[#allocation9 + $0x50] sm:$0xff]
    %v274 = vld [vmem:[#allocation9 + $0x58] sm:$0xff]
    %v275 = vld [vmem:[#allocation9 + $0x60] sm:$0xff]
    %v276 = vld [vmem:[#allocation9 + $0x68] sm:$0xff]
    %v277 = vld [vmem:[#allocation9 + $0x70] sm:$0xff]
    %v278 = vld [vmem:[#allocation9 + $0x78] sm:$0xff]
    %v279 = vld [vmem:[%s6] sm:$0x1]
    %v281 = vlaneseq
    %v282 = vshrl.u32 %v281, 7
    %v283 = vsub.s32 0, %v282
    %v284 = vrot.slane %v279, %v283
    %286 = vmatprep.subr.mxu0 0.0
    %287 = vmatpush1.msra.mxu0 %v278
    %288 = vmatprep.subr.mxu0 0.0
    %289 = vmatpush1.msra.mxu0 %v277
    %290 = vmatprep.subr.mxu0 0.0
    %291 = vmatpush1.msra.mxu0 %v276
    %292 = vmatprep.subr.mxu0 0.0
    %293 = vmatpush1.msra.mxu0 %v275
    %294 = vmatprep.subr.mxu0 0.0
    %295 = vmatpush1.msra.mxu0 %v274
    %296 = vmatprep.subr.mxu0 0.0
    %297 = vmatpush1.msra.mxu0 %v273
    %298 = vmatprep.subr.mxu0 0.0
    %299 = vmatpush1.msra.mxu0 %v272
    %300 = vmatprep.subr.mxu0 0.0
    %301 = vmatpush1.msra.mxu0 %v271
    %302 = vmatprep.subr.mxu0 0.0
    %303 = vmatpush1.msra.mxu0 %v270
    %304 = vmatprep.subr.mxu0 0.0
    %305 = vmatpush1.msra.mxu0 %v269
    %306 = vmatprep.subr.mxu0 0.0
    %307 = vmatpush1.msra.mxu0 %v268
    %308 = vmatprep.subr.mxu0 0.0
    %309 = vmatpush1.msra.mxu0 %v267
    %310 = vmatprep.subr.mxu0 0.0
    %311 = vmatpush1.msra.mxu0 %v266
    %312 = vmatprep.subr.mxu0 0.0
    %313 = vmatpush1.msra.mxu0 %v265
    %314 = vmatprep.subr.mxu0 0.0
    %315 = vmatpush1.msra.mxu0 %v264
    %316 = vmatprep.subr.mxu0 0.0
    %317 = vmatpush1.msra.mxu0 %v263
    %318 = vmatprep.subr.mxu0 0.0
    %319 = vmatpush2.msra.mxu0 0.0
    %320 = vmatprep.subr.mxu0 0.0
    %321 = vmatpush2.msra.mxu0 0.0
    %322 = vmatprep.subr.mxu0 0.0
    %323 = vmatpush2.msra.mxu0 0.0
    %324 = vmatprep.subr.mxu0 0.0
    %325 = vmatpush2.msra.mxu0 0.0
    %326 = vmatprep.subr.mxu0 0.0
    %327 = vmatpush2.msra.mxu0 0.0
    %328 = vmatprep.subr.mxu0 0.0
    %329 = vmatpush2.msra.mxu0 0.0
    %330 = vmatprep.subr.mxu0 0.0
    %331 = vmatpush2.msra.mxu0 0.0
    %332 = vmatprep.subr.mxu0 0.0
    %333 = vmatpush2.msra.mxu0 0.0
    %334 = vmatprep.subr.mxu0 0.0
    %335 = vmatpush2.msra.mxu0 0.0
    %336 = vmatprep.subr.mxu0 0.0
    %337 = vmatpush2.msra.mxu0 0.0
    %338 = vmatprep.subr.mxu0 0.0
    %339 = vmatpush2.msra.mxu0 0.0
    %340 = vmatprep.subr.mxu0 0.0
    %341 = vmatpush2.msra.mxu0 0.0
    %342 = vmatprep.subr.mxu0 0.0
    %343 = vmatpush2.msra.mxu0 0.0
    %344 = vmatprep.subr.mxu0 0.0
    %345 = vmatpush2.msra.mxu0 0.0
    %346 = vmatprep.subr.mxu0 0.0
    %347 = vmatpush2.msra.mxu0 0.0
    %348 = vmatprep.subr.mxu0 0.0
    %349 = vmatpush2.msra.mxu0 0.0
    %350 = vmatprep.mubr.f32.mxu0 0.0
    %351 = vmatmul.mubr.f32.gmra.mxu0 %v168
    %v352 = vpop.f32.mrf.mxu0
    %v353 = vadd.f32 %v284, %v352
    %v354 = vpop.f32.mrf.mxu0
    %355 = vdwg.mxu0
    %v356 = vmax.f32 %v353, 0.0
    %v357 = vld [vmem:[#allocation10] sm:$0xff]
    %v358 = vld [vmem:[#allocation10 + $0x8] sm:$0xff]
    %v359 = vld [vmem:[#allocation10 + $0x10] sm:$0xff]
    %v360 = vld [vmem:[#allocation10 + $0x18] sm:$0xff]
    %v361 = vld [vmem:[#allocation10 + $0x20] sm:$0xff]
    %v362 = vld [vmem:[#allocation10 + $0x28] sm:$0xff]
    %v363 = vld [vmem:[#allocation10 + $0x30] sm:$0xff]
    %v364 = vld [vmem:[#allocation10 + $0x38] sm:$0xff]
    %v365 = vld [vmem:[#allocation10 + $0x40] sm:$0xff]
    %v366 = vld [vmem:[#allocation10 + $0x48] sm:$0xff]
    %v367 = vld [vmem:[#allocation10 + $0x50] sm:$0xff]
    %v368 = vld [vmem:[#allocation10 + $0x58] sm:$0xff]
    %v369 = vld [vmem:[#allocation10 + $0x60] sm:$0xff]
    %v370 = vld [vmem:[#allocation10 + $0x68] sm:$0xff]
    %v371 = vld [vmem:[#allocation10 + $0x70] sm:$0xff]
    %v372 = vld [vmem:[#allocation10 + $0x78] sm:$0xff]
    %v373 = vld [vmem:[#allocation10 + $0x80] sm:$0xff]
    %v374 = vld [vmem:[#allocation10 + $0x88] sm:$0xff]
    %v375 = vld [vmem:[#allocation10 + $0x90] sm:$0xff]
    %v376 = vld [vmem:[#allocation10 + $0x98] sm:$0xff]
    %v377 = vld [vmem:[#allocation10 + $0xa0] sm:$0xff]
    %v378 = vld [vmem:[#allocation10 + $0xa8] sm:$0xff]
    %v379 = vld [vmem:[#allocation10 + $0xb0] sm:$0xff]
    %v380 = vld [vmem:[#allocation10 + $0xb8] sm:$0xff]
    %v381 = vld [vmem:[#allocation10 + $0xc0] sm:$0xff]
    %v382 = vld [vmem:[#allocation10 + $0xc8] sm:$0xff]
    %v383 = vld [vmem:[#allocation10 + $0xd0] sm:$0xff]
    %v384 = vld [vmem:[#allocation10 + $0xd8] sm:$0xff]
    %v385 = vld [vmem:[#allocation10 + $0xe0] sm:$0xff]
    %v386 = vld [vmem:[#allocation10 + $0xe8] sm:$0xff]
    %v387 = vld [vmem:[#allocation10 + $0xf0] sm:$0xff]
    %v388 = vld [vmem:[#allocation10 + $0xf8] sm:$0xff]
    %v389 = vld [vmem:[#allocation10 + $0x100] sm:$0xff]
    %v390 = vld [vmem:[#allocation10 + $0x108] sm:$0xff]
    %v391 = vld [vmem:[#allocation10 + $0x110] sm:$0xff]
    %v392 = vld [vmem:[#allocation10 + $0x118] sm:$0xff]
    %v393 = vld [vmem:[#allocation10 + $0x120] sm:$0xff]
    %v394 = vld [vmem:[#allocation10 + $0x128] sm:$0xff]
    %v395 = vld [vmem:[#allocation10 + $0x130] sm:$0xff]
    %v396 = vld [vmem:[#allocation10 + $0x138] sm:$0xff]
    %v397 = vld [vmem:[#allocation10 + $0x140] sm:$0xff]
    %v398 = vld [vmem:[#allocation10 + $0x148] sm:$0xff]
    %v399 = vld [vmem:[#allocation10 + $0x150] sm:$0xff]
    %v400 = vld [vmem:[#allocation10 + $0x158] sm:$0xff]
    %v401 = vld [vmem:[#allocation10 + $0x160] sm:$0xff]
    %v402 = vld [vmem:[#allocation10 + $0x168] sm:$0xff]
    %v403 = vld [vmem:[#allocation10 + $0x170] sm:$0xff]
    %v404 = vld [vmem:[#allocation10 + $0x178] sm:$0xff]
    %v405 = vld [vmem:[#allocation12] sm:$0xff]
    %v406 = vld [vmem:[#allocation12 + $0x8] sm:$0xff]
    %v407 = vld [vmem:[#allocation12 + $0x10] sm:$0xff]
    %v408 = vld [vmem:[#allocation12 + $0x18] sm:$0xff]
    %v409 = vld [vmem:[#allocation12 + $0x20] sm:$0xff]
    %v410 = vld [vmem:[#allocation12 + $0x28] sm:$0xff]
    %v411 = vld [vmem:[#allocation12 + $0x30] sm:$0xff]
    %v412 = vld [vmem:[#allocation12 + $0x38] sm:$0xff]
    %v413 = vld [vmem:[#allocation12 + $0x40] sm:$0xff]
    %v414 = vld [vmem:[#allocation12 + $0x48] sm:$0xff]
    %v415 = vld [vmem:[#allocation12 + $0x50] sm:$0xff]
    %v416 = vld [vmem:[#allocation12 + $0x58] sm:$0xff]
    %v417 = vld [vmem:[#allocation12 + $0x60] sm:$0xff]
    %v418 = vld [vmem:[#allocation12 + $0x68] sm:$0xff]
    %v419 = vld [vmem:[#allocation12 + $0x70] sm:$0xff]
    %v420 = vld [vmem:[#allocation12 + $0x78] sm:$0xff]
    %v421 = vld [vmem:[#allocation12 + $0x80] sm:$0xff]
    %v422 = vld [vmem:[#allocation12 + $0x88] sm:$0xff]
    %v423 = vld [vmem:[#allocation12 + $0x90] sm:$0xff]
    %v424 = vld [vmem:[#allocation12 + $0x98] sm:$0xff]
    %v425 = vld [vmem:[#allocation12 + $0xa0] sm:$0xff]
    %v426 = vld [vmem:[#allocation12 + $0xa8] sm:$0xff]
    %v427 = vld [vmem:[#allocation12 + $0xb0] sm:$0xff]
    %v428 = vld [vmem:[#allocation12 + $0xb8] sm:$0xff]
    %v429 = vld [vmem:[#allocation12 + $0xc0] sm:$0xff]
    %v430 = vld [vmem:[#allocation12 + $0xc8] sm:$0xff]
    %v431 = vld [vmem:[#allocation12 + $0xd0] sm:$0xff]
    %v432 = vld [vmem:[#allocation12 + $0xd8] sm:$0xff]
    %v433 = vld [vmem:[#allocation12 + $0xe0] sm:$0xff]
    %v434 = vld [vmem:[#allocation12 + $0xe8] sm:$0xff]
    %v435 = vld [vmem:[#allocation12 + $0xf0] sm:$0xff]
    %v436 = vld [vmem:[#allocation12 + $0xf8] sm:$0xff]
    %v437 = vld [vmem:[#allocation12 + $0x100] sm:$0xff]
    %v438 = vld [vmem:[#allocation12 + $0x108] sm:$0xff]
    %v439 = vld [vmem:[#allocation12 + $0x110] sm:$0xff]
    %v440 = vld [vmem:[#allocation12 + $0x118] sm:$0xff]
    %v441 = vld [vmem:[#allocation12 + $0x120] sm:$0xff]
    %v442 = vld [vmem:[#allocation12 + $0x128] sm:$0xff]
    %v443 = vld [vmem:[#allocation12 + $0x130] sm:$0xff]
    %v444 = vld [vmem:[#allocation12 + $0x138] sm:$0xff]
    %v445 = vld [vmem:[#allocation12 + $0x140] sm:$0xff]
    %v446 = vld [vmem:[#allocation12 + $0x148] sm:$0xff]
    %v447 = vld [vmem:[#allocation12 + $0x150] sm:$0xff]
    %v448 = vld [vmem:[#allocation12 + $0x158] sm:$0xff]
    %v449 = vld [vmem:[#allocation12 + $0x160] sm:$0xff]
    %v450 = vld [vmem:[#allocation12 + $0x168] sm:$0xff]
    %v451 = vld [vmem:[#allocation12 + $0x170] sm:$0xff]
    %v452 = vld [vmem:[#allocation12 + $0x178] sm:$0xff]
    %453 = vmatprep.subr.mxu0 %v451
    %454 = vmatpush1.msra.mxu0 %v450
    %455 = vmatprep.subr.mxu0 %v448
    %456 = vmatpush1.msra.mxu0 %v447
    %457 = vmatprep.subr.mxu0 %v445
    %458 = vmatpush1.msra.mxu0 %v444
    %459 = vmatprep.subr.mxu0 %v442
    %460 = vmatpush1.msra.mxu0 %v441
    %461 = vmatprep.subr.mxu0 %v439
    %462 = vmatpush1.msra.mxu0 %v438
    %463 = vmatprep.subr.mxu0 %v436
    %464 = vmatpush1.msra.mxu0 %v435
    %465 = vmatprep.subr.mxu0 %v433
    %466 = vmatpush1.msra.mxu0 %v432
    %467 = vmatprep.subr.mxu0 %v430
    %468 = vmatpush1.msra.mxu0 %v429
    %469 = vmatprep.subr.mxu0 %v427
    %470 = vmatpush1.msra.mxu0 %v426
    %471 = vmatprep.subr.mxu0 %v424
    %472 = vmatpush1.msra.mxu0 %v423
    %473 = vmatprep.subr.mxu0 %v421
    %474 = vmatpush1.msra.mxu0 %v420
    %475 = vmatprep.subr.mxu0 %v418
    %476 = vmatpush1.msra.mxu0 %v417
    %477 = vmatprep.subr.mxu0 %v415
    %478 = vmatpush1.msra.mxu0 %v414
    %479 = vmatprep.subr.mxu0 %v412
    %480 = vmatpush1.msra.mxu0 %v411
    %481 = vmatprep.subr.mxu0 %v409
    %482 = vmatpush1.msra.mxu0 %v408
    %483 = vmatprep.subr.mxu0 %v406
    %484 = vmatpush1.msra.mxu0 %v405
    %485 = vmatprep.subr.mxu0 0.0
    %486 = vmatpush2.msra.mxu0 0.0
    %487 = vmatprep.subr.mxu0 0.0
    %488 = vmatpush2.msra.mxu0 0.0
    %489 = vmatprep.subr.mxu0 0.0
    %490 = vmatpush2.msra.mxu0 0.0
    %491 = vmatprep.subr.mxu0 0.0
    %492 = vmatpush2.msra.mxu0 0.0
    %493 = vmatprep.subr.mxu0 0.0
    %494 = vmatpush2.msra.mxu0 0.0
    %495 = vmatprep.subr.mxu0 0.0
    %496 = vmatpush2.msra.mxu0 0.0
    %497 = vmatprep.subr.mxu0 0.0
    %498 = vmatpush2.msra.mxu0 0.0
    %499 = vmatprep.subr.mxu0 0.0
    %500 = vmatpush2.msra.mxu0 0.0
    %501 = vmatprep.subr.mxu0 0.0
    %502 = vmatpush2.msra.mxu0 0.0
    %503 = vmatprep.subr.mxu0 0.0
    %504 = vmatpush2.msra.mxu0 0.0
    %505 = vmatprep.subr.mxu0 0.0
    %506 = vmatpush2.msra.mxu0 0.0
    %507 = vmatprep.subr.mxu0 0.0
    %508 = vmatpush2.msra.mxu0 0.0
    %509 = vmatprep.subr.mxu0 0.0
    %510 = vmatpush2.msra.mxu0 0.0
    %511 = vmatprep.subr.mxu0 0.0
    %512 = vmatpush2.msra.mxu0 0.0
    %513 = vmatprep.subr.mxu0 0.0
    %514 = vmatpush2.msra.mxu0 0.0
    %515 = vmatprep.subr.mxu0 0.0
    %516 = vmatpush2.msra.mxu0 0.0
    %517 = vmatprep.mubr.f32.mxu0 0.0
    %518 = vmatmul.mubr.f32.gmra.mxu0 %v356
    %v519 = vpop.f32.mrf.mxu0
    %v520 = vadd.f32 0.0, %v519
    %v521 = vpop.f32.mrf.mxu0
    %v522 = vadd.f32 0.0, %v521
    %523 = vdwg.mxu0
    %524 = vmatprep.subr.mxu0 0.0
    %525 = vmatpush1.msra.mxu0 %v452
    %526 = vmatprep.subr.mxu0 0.0
    %527 = vmatpush1.msra.mxu0 %v449
    %528 = vmatprep.subr.mxu0 0.0
    %529 = vmatpush1.msra.mxu0 %v446
    %530 = vmatprep.subr.mxu0 0.0
    %531 = vmatpush1.msra.mxu0 %v443
    %532 = vmatprep.subr.mxu0 0.0
    %533 = vmatpush1.msra.mxu0 %v440
    %534 = vmatprep.subr.mxu0 0.0
    %535 = vmatpush1.msra.mxu0 %v437
    %536 = vmatprep.subr.mxu0 0.0
    %537 = vmatpush1.msra.mxu0 %v434
    %538 = vmatprep.subr.mxu0 0.0
    %539 = vmatpush1.msra.mxu0 %v431
    %540 = vmatprep.subr.mxu0 0.0
    %541 = vmatpush1.msra.mxu0 %v428
    %542 = vmatprep.subr.mxu0 0.0
    %543 = vmatpush1.msra.mxu0 %v425
    %544 = vmatprep.subr.mxu0 0.0
    %545 = vmatpush1.msra.mxu0 %v422
    %546 = vmatprep.subr.mxu0 0.0
    %547 = vmatpush1.msra.mxu0 %v419
    %548 = vmatprep.subr.mxu0 0.0
    %549 = vmatpush1.msra.mxu0 %v416
    %550 = vmatprep.subr.mxu0 0.0
    %551 = vmatpush1.msra.mxu0 %v413
    %552 = vmatprep.subr.mxu0 0.0
    %553 = vmatpush1.msra.mxu0 %v410
    %554 = vmatprep.subr.mxu0 0.0
    %555 = vmatpush1.msra.mxu0 %v407
    %556 = vmatprep.subr.mxu0 0.0
    %557 = vmatpush2.msra.mxu0 0.0
    %558 = vmatprep.subr.mxu0 0.0
    %559 = vmatpush2.msra.mxu0 0.0
    %560 = vmatprep.subr.mxu0 0.0
    %561 = vmatpush2.msra.mxu0 0.0
    %562 = vmatprep.subr.mxu0 0.0
    %563 = vmatpush2.msra.mxu0 0.0
    %564 = vmatprep.subr.mxu0 0.0
    %565 = vmatpush2.msra.mxu0 0.0
    %566 = vmatprep.subr.mxu0 0.0
    %567 = vmatpush2.msra.mxu0 0.0
    %568 = vmatprep.subr.mxu0 0.0
    %569 = vmatpush2.msra.mxu0 0.0
    %570 = vmatprep.subr.mxu0 0.0
    %571 = vmatpush2.msra.mxu0 0.0
    %572 = vmatprep.subr.mxu0 0.0
    %573 = vmatpush2.msra.mxu0 0.0
    %574 = vmatprep.subr.mxu0 0.0
    %575 = vmatpush2.msra.mxu0 0.0
    %576 = vmatprep.subr.mxu0 0.0
    %577 = vmatpush2.msra.mxu0 0.0
    %578 = vmatprep.subr.mxu0 0.0
    %579 = vmatpush2.msra.mxu0 0.0
    %580 = vmatprep.subr.mxu0 0.0
    %581 = vmatpush2.msra.mxu0 0.0
    %582 = vmatprep.subr.mxu0 0.0
    %583 = vmatpush2.msra.mxu0 0.0
    %584 = vmatprep.subr.mxu0 0.0
    %585 = vmatpush2.msra.mxu0 0.0
    %586 = vmatprep.subr.mxu0 0.0
    %587 = vmatpush2.msra.mxu0 0.0
    %588 = vmatprep.mubr.f32.mxu0 0.0
    %589 = vmatmul.mubr.f32.gmra.mxu0 %v356
    %v590 = vpop.f32.mrf.mxu0
    %v591 = vadd.f32 0.0, %v590
    %v592 = vpop.f32.mrf.mxu0
    %593 = vdwg.mxu0
    %594 = vmatprep.subr.mxu0 %v403
    %595 = vmatpush1.msra.mxu0 %v402
    %596 = vmatprep.subr.mxu0 %v400
    %597 = vmatpush1.msra.mxu0 %v399
    %598 = vmatprep.subr.mxu0 %v397
    %599 = vmatpush1.msra.mxu0 %v396
    %600 = vmatprep.subr.mxu0 %v394
    %601 = vmatpush1.msra.mxu0 %v393
    %602 = vmatprep.subr.mxu0 %v391
    %603 = vmatpush1.msra.mxu0 %v390
    %604 = vmatprep.subr.mxu0 %v388
    %605 = vmatpush1.msra.mxu0 %v387
    %606 = vmatprep.subr.mxu0 %v385
    %607 = vmatpush1.msra.mxu0 %v384
    %608 = vmatprep.subr.mxu0 %v382
    %609 = vmatpush1.msra.mxu0 %v381
    %610 = vmatprep.subr.mxu0 %v379
    %611 = vmatpush1.msra.mxu0 %v378
    %612 = vmatprep.subr.mxu0 %v376
    %613 = vmatpush1.msra.mxu0 %v375
    %614 = vmatprep.subr.mxu0 %v373
    %615 = vmatpush1.msra.mxu0 %v372
    %616 = vmatprep.subr.mxu0 %v370
    %617 = vmatpush1.msra.mxu0 %v369
    %618 = vmatprep.subr.mxu0 %v367
    %619 = vmatpush1.msra.mxu0 %v366
    %620 = vmatprep.subr.mxu0 %v364
    %621 = vmatpush1.msra.mxu0 %v363
    %622 = vmatprep.subr.mxu0 %v361
    %623 = vmatpush1.msra.mxu0 %v360
    %624 = vmatprep.subr.mxu0 %v358
    %625 = vmatpush1.msra.mxu0 %v357
    %626 = vmatprep.subr.mxu0 0.0
    %627 = vmatpush2.msra.mxu0 0.0
    %628 = vmatprep.subr.mxu0 0.0
    %629 = vmatpush2.msra.mxu0 0.0
    %630 = vmatprep.subr.mxu0 0.0
    %631 = vmatpush2.msra.mxu0 0.0
    %632 = vmatprep.subr.mxu0 0.0
    %633 = vmatpush2.msra.mxu0 0.0
    %634 = vmatprep.subr.mxu0 0.0
    %635 = vmatpush2.msra.mxu0 0.0
    %636 = vmatprep.subr.mxu0 0.0
    %637 = vmatpush2.msra.mxu0 0.0
    %638 = vmatprep.subr.mxu0 0.0
    %639 = vmatpush2.msra.mxu0 0.0
    %640 = vmatprep.subr.mxu0 0.0
    %641 = vmatpush2.msra.mxu0 0.0
    %642 = vmatprep.subr.mxu0 0.0
    %643 = vmatpush2.msra.mxu0 0.0
    %644 = vmatprep.subr.mxu0 0.0
    %645 = vmatpush2.msra.mxu0 0.0
    %646 = vmatprep.subr.mxu0 0.0
    %647 = vmatpush2.msra.mxu0 0.0
    %648 = vmatprep.subr.mxu0 0.0
    %649 = vmatpush2.msra.mxu0 0.0
    %650 = vmatprep.subr.mxu0 0.0
    %651 = vmatpush2.msra.mxu0 0.0
    %652 = vmatprep.subr.mxu0 0.0
    %653 = vmatpush2.msra.mxu0 0.0
    %654 = vmatprep.subr.mxu0 0.0
    %655 = vmatpush2.msra.mxu0 0.0
    %656 = vmatprep.subr.mxu0 0.0
    %657 = vmatpush2.msra.mxu0 0.0
    %658 = vmatprep.mubr.f32.mxu0 0.0
    %659 = vmatmul.mubr.f32.gmra.mxu0 %v262
    %v660 = vpop.f32.mrf.mxu0
    %v661 = vadd.f32 %v520, %v660
    %v662 = vpop.f32.mrf.mxu0
    %v663 = vadd.f32 %v522, %v662
    %664 = vdwg.mxu0
    %665 = vmatprep.subr.mxu0 0.0
    %666 = vmatpush1.msra.mxu0 %v404
    %667 = vmatprep.subr.mxu0 0.0
    %668 = vmatpush1.msra.mxu0 %v401
    %669 = vmatprep.subr.mxu0 0.0
    %670 = vmatpush1.msra.mxu0 %v398
    %671 = vmatprep.subr.mxu0 0.0
    %672 = vmatpush1.msra.mxu0 %v395
    %673 = vmatprep.subr.mxu0 0.0
    %674 = vmatpush1.msra.mxu0 %v392
    %675 = vmatprep.subr.mxu0 0.0
    %676 = vmatpush1.msra.mxu0 %v389
    %677 = vmatprep.subr.mxu0 0.0
    %678 = vmatpush1.msra.mxu0 %v386
    %679 = vmatprep.subr.mxu0 0.0
    %680 = vmatpush1.msra.mxu0 %v383
    %681 = vmatprep.subr.mxu0 0.0
    %682 = vmatpush1.msra.mxu0 %v380
    %683 = vmatprep.subr.mxu0 0.0
    %684 = vmatpush1.msra.mxu0 %v377
    %685 = vmatprep.subr.mxu0 0.0
    %686 = vmatpush1.msra.mxu0 %v374
    %687 = vmatprep.subr.mxu0 0.0
    %688 = vmatpush1.msra.mxu0 %v371
    %689 = vmatprep.subr.mxu0 0.0
    %690 = vmatpush1.msra.mxu0 %v368
    %691 = vmatprep.subr.mxu0 0.0
    %692 = vmatpush1.msra.mxu0 %v365
    %693 = vmatprep.subr.mxu0 0.0
    %694 = vmatpush1.msra.mxu0 %v362
    %695 = vmatprep.subr.mxu0 0.0
    %696 = vmatpush1.msra.mxu0 %v359
    %697 = vmatprep.subr.mxu0 0.0
    %698 = vmatpush2.msra.mxu0 0.0
    %699 = vmatprep.subr.mxu0 0.0
    %700 = vmatpush2.msra.mxu0 0.0
    %701 = vmatprep.subr.mxu0 0.0
    %702 = vmatpush2.msra.mxu0 0.0
    %703 = vmatprep.subr.mxu0 0.0
    %704 = vmatpush2.msra.mxu0 0.0
    %705 = vmatprep.subr.mxu0 0.0
    %706 = vmatpush2.msra.mxu0 0.0
    %707 = vmatprep.subr.mxu0 0.0
    %708 = vmatpush2.msra.mxu0 0.0
    %709 = vmatprep.subr.mxu0 0.0
    %710 = vmatpush2.msra.mxu0 0.0
    %711 = vmatprep.subr.mxu0 0.0
    %712 = vmatpush2.msra.mxu0 0.0
    %713 = vmatprep.subr.mxu0 0.0
    %714 = vmatpush2.msra.mxu0 0.0
    %715 = vmatprep.subr.mxu0 0.0
    %716 = vmatpush2.msra.mxu0 0.0
    %717 = vmatprep.subr.mxu0 0.0
    %718 = vmatpush2.msra.mxu0 0.0
    %719 = vmatprep.subr.mxu0 0.0
    %720 = vmatpush2.msra.mxu0 0.0
    %721 = vmatprep.subr.mxu0 0.0
    %722 = vmatpush2.msra.mxu0 0.0
    %723 = vmatprep.subr.mxu0 0.0
    %724 = vmatpush2.msra.mxu0 0.0
    %725 = vmatprep.subr.mxu0 0.0
    %726 = vmatpush2.msra.mxu0 0.0
    %727 = vmatprep.subr.mxu0 0.0
    %728 = vmatpush2.msra.mxu0 0.0
    %729 = vmatprep.mubr.f32.mxu0 0.0
    %730 = vmatmul.mubr.f32.gmra.mxu0 %v262
    %v731 = vpop.f32.mrf.mxu0
    %v732 = vadd.f32 %v591, %v731
    %v733 = vpop.f32.mrf.mxu0
    %734 = vdwg.mxu0
    %v735 = vld [vmem:[%s9] sm:$0x7]
    %v737 = vlaneseq
    %v738 = vshrl.u32 %v737, 7
    %v739 = vsub.s32 0, %v738
    %v740 = vrot.slane %v735, %v739
    %v741 = vlaneseq
    %v742 = vshrl.u32 %v741, 7
    %v743 = vsub.s32 1, %v742
    %v744 = vrot.slane %v735, %v743
    %v745 = vlaneseq
    %v746 = vshrl.u32 %v745, 7
    %v747 = vsub.s32 2, %v746
    %v748 = vrot.slane %v735, %v747
    %v752 = vadd.f32 %v661, %v740
    %v753 = vadd.f32 %v663, %v744
    %v754 = vadd.f32 %v732, %v748
    %755 = vst [vmem:[#allocation2] sm:$0xff] %v752
    %756 = vst [vmem:[#allocation2 + $0x8] sm:$0xff] %v753
    %757 = vst [vmem:[#allocation2 + $0x10] sm:$0xff] %v754
    %p758 = scmp.eq.s32.totalorder 0, 0
    // Predicated region
    $region94: #{tpu_custom_call.1} parent=1 // pred_check
      %p759 = pneg %p758
    $region95: #{tpu_custom_call.1} parent=1 // pred_check_branch
      %761 = sbr.rel (%p759) target = $region97
    $region96: #{tpu_custom_call.1} parent=1 // pred_region
      %v762 = vld [vmem:[#allocation4] sm:$0xff]
      %763 = vst [vmem:[#allocation20] sm:$0xff] %v762
    $region97: #{tpu_custom_call.1} parent=1 // pred_fallthru
      _
    %v764 = vld [vmem:[#allocation20] sm:$0xff]
    %v765 = vld [vmem:[#allocation2] sm:$0xff]
    %v766 = vld [vmem:[#allocation2 + $0x8] sm:$0xff]
    %v767 = vld [vmem:[#allocation2 + $0x10] sm:$0xff]
    %v768 = vld [vmem:[#allocation13] sm:$0xff]
    %v769 = vld [vmem:[#allocation13 + $0x8] sm:$0xff]
    %v770 = vld [vmem:[#allocation13 + $0x10] sm:$0xff]
    %v771 = vld [vmem:[#allocation13 + $0x18] sm:$0xff]
    %v772 = vld [vmem:[#allocation13 + $0x20] sm:$0xff]
    %v773 = vld [vmem:[#allocation13 + $0x28] sm:$0xff]
    %v774 = vld [vmem:[#allocation13 + $0x30] sm:$0xff]
    %v775 = vld [vmem:[#allocation13 + $0x38] sm:$0xff]
    %v776 = vld [vmem:[#allocation13 + $0x40] sm:$0xff]
    %v777 = vld [vmem:[#allocation13 + $0x48] sm:$0xff]
    %v778 = vld [vmem:[#allocation13 + $0x50] sm:$0xff]
    %v779 = vld [vmem:[#allocation13 + $0x58] sm:$0xff]
    %v780 = vld [vmem:[#allocation13 + $0x60] sm:$0xff]
    %v781 = vld [vmem:[#allocation13 + $0x68] sm:$0xff]
    %v782 = vld [vmem:[#allocation13 + $0x70] sm:$0xff]
    %v783 = vld [vmem:[#allocation13 + $0x78] sm:$0xff]
    %v784 = vld [vmem:[#allocation13 + $0x80] sm:$0xff]
    %v785 = vld [vmem:[#allocation13 + $0x88] sm:$0xff]
    %v786 = vld [vmem:[#allocation13 + $0x90] sm:$0xff]
    %v787 = vld [vmem:[#allocation13 + $0x98] sm:$0xff]
    %v788 = vld [vmem:[#allocation13 + $0xa0] sm:$0xff]
    %v789 = vld [vmem:[#allocation13 + $0xa8] sm:$0xff]
    %v790 = vld [vmem:[#allocation13 + $0xb0] sm:$0xff]
    %v791 = vld [vmem:[#allocation13 + $0xb8] sm:$0xff]
    %v792 = vld [vmem:[#allocation13 + $0xc0] sm:$0xff]
    %v793 = vld [vmem:[#allocation13 + $0xc8] sm:$0xff]
    %v794 = vld [vmem:[#allocation13 + $0xd0] sm:$0xff]
    %v795 = vld [vmem:[#allocation13 + $0xd8] sm:$0xff]
    %v796 = vld [vmem:[#allocation13 + $0xe0] sm:$0xff]
    %v797 = vld [vmem:[#allocation13 + $0xe8] sm:$0xff]
    %v798 = vld [vmem:[#allocation13 + $0xf0] sm:$0xff]
    %v799 = vld [vmem:[#allocation13 + $0xf8] sm:$0xff]
    %v800 = vld [vmem:[#allocation13 + $0x100] sm:$0xff]
    %v801 = vld [vmem:[#allocation13 + $0x108] sm:$0xff]
    %v802 = vld [vmem:[#allocation13 + $0x110] sm:$0xff]
    %v803 = vld [vmem:[#allocation13 + $0x118] sm:$0xff]
    %v804 = vld [vmem:[#allocation13 + $0x120] sm:$0xff]
    %v805 = vld [vmem:[#allocation13 + $0x128] sm:$0xff]
    %v806 = vld [vmem:[#allocation13 + $0x130] sm:$0xff]
    %v807 = vld [vmem:[#allocation13 + $0x138] sm:$0xff]
    %v808 = vld [vmem:[#allocation13 + $0x140] sm:$0xff]
    %v809 = vld [vmem:[#allocation13 + $0x148] sm:$0xff]
    %v810 = vld [vmem:[#allocation13 + $0x150] sm:$0xff]
    %v811 = vld [vmem:[#allocation13 + $0x158] sm:$0xff]
    %v812 = vld [vmem:[#allocation13 + $0x160] sm:$0xff]
    %v813 = vld [vmem:[#allocation13 + $0x168] sm:$0xff]
    %v814 = vld [vmem:[#allocation13 + $0x170] sm:$0xff]
    %v815 = vld [vmem:[#allocation13 + $0x178] sm:$0xff]
    %v816 = vld [vmem:[#allocation15] sm:$0x7]
    %v818 = vlaneseq
    %v819 = vshrl.u32 %v818, 7
    %v820 = vsub.s32 0, %v819
    %v821 = vrot.slane %v816, %v820
    %v822 = vlaneseq
    %v823 = vshrl.u32 %v822, 7
    %v824 = vsub.s32 1, %v823
    %v825 = vrot.slane %v816, %v824
    %v826 = vlaneseq
    %v827 = vshrl.u32 %v826, 7
    %v828 = vsub.s32 2, %v827
    %v829 = vrot.slane %v816, %v828
    %833 = vmatprep.subr.mxu0 %v814
    %834 = vmatpush1.msra.mxu0 %v813
    %835 = vmatprep.subr.mxu0 %v811
    %836 = vmatpush1.msra.mxu0 %v810
    %837 = vmatprep.subr.mxu0 %v808
    %838 = vmatpush1.msra.mxu0 %v807
    %839 = vmatprep.subr.mxu0 %v805
    %840 = vmatpush1.msra.mxu0 %v804
    %841 = vmatprep.subr.mxu0 %v802
    %842 = vmatpush1.msra.mxu0 %v801
    %843 = vmatprep.subr.mxu0 %v799
    %844 = vmatpush1.msra.mxu0 %v798
    %845 = vmatprep.subr.mxu0 %v796
    %846 = vmatpush1.msra.mxu0 %v795
    %847 = vmatprep.subr.mxu0 %v793
    %848 = vmatpush1.msra.mxu0 %v792
    %849 = vmatprep.subr.mxu0 %v790
    %850 = vmatpush1.msra.mxu0 %v789
    %851 = vmatprep.subr.mxu0 %v787
    %852 = vmatpush1.msra.mxu0 %v786
    %853 = vmatprep.subr.mxu0 %v784
    %854 = vmatpush1.msra.mxu0 %v783
    %855 = vmatprep.subr.mxu0 %v781
    %856 = vmatpush1.msra.mxu0 %v780
    %857 = vmatprep.subr.mxu0 %v778
    %858 = vmatpush1.msra.mxu0 %v777
    %859 = vmatprep.subr.mxu0 %v775
    %860 = vmatpush1.msra.mxu0 %v774
    %861 = vmatprep.subr.mxu0 %v772
    %862 = vmatpush1.msra.mxu0 %v771
    %863 = vmatprep.subr.mxu0 %v769
    %864 = vmatpush1.msra.mxu0 %v768
    %865 = vmatprep.subr.mxu0 0.0
    %866 = vmatpush2.msra.mxu0 0.0
    %867 = vmatprep.subr.mxu0 0.0
    %868 = vmatpush2.msra.mxu0 0.0
    %869 = vmatprep.subr.mxu0 0.0
    %870 = vmatpush2.msra.mxu0 0.0
    %871 = vmatprep.subr.mxu0 0.0
    %872 = vmatpush2.msra.mxu0 0.0
    %873 = vmatprep.subr.mxu0 0.0
    %874 = vmatpush2.msra.mxu0 0.0
    %875 = vmatprep.subr.mxu0 0.0
    %876 = vmatpush2.msra.mxu0 0.0
    %877 = vmatprep.subr.mxu0 0.0
    %878 = vmatpush2.msra.mxu0 0.0
    %879 = vmatprep.subr.mxu0 0.0
    %880 = vmatpush2.msra.mxu0 0.0
    %881 = vmatprep.subr.mxu0 0.0
    %882 = vmatpush2.msra.mxu0 0.0
    %883 = vmatprep.subr.mxu0 0.0
    %884 = vmatpush2.msra.mxu0 0.0
    %885 = vmatprep.subr.mxu0 0.0
    %886 = vmatpush2.msra.mxu0 0.0
    %887 = vmatprep.subr.mxu0 0.0
    %888 = vmatpush2.msra.mxu0 0.0
    %889 = vmatprep.subr.mxu0 0.0
    %890 = vmatpush2.msra.mxu0 0.0
    %891 = vmatprep.subr.mxu0 0.0
    %892 = vmatpush2.msra.mxu0 0.0
    %893 = vmatprep.subr.mxu0 0.0
    %894 = vmatpush2.msra.mxu0 0.0
    %895 = vmatprep.subr.mxu0 0.0
    %896 = vmatpush2.msra.mxu0 0.0
    %897 = vmatprep.mubr.f32.mxu0 0.0
    %898 = vmatmul.mubr.f32.gmra.mxu0 %v764
    %v899 = vpop.f32.mrf.mxu0
    %v900 = vadd.f32 %v821, %v899
    %v901 = vpop.f32.mrf.mxu0
    %v902 = vadd.f32 %v825, %v901
    %903 = vdwg.mxu0
    %904 = vmatprep.subr.mxu0 0.0
    %905 = vmatpush1.msra.mxu0 %v815
    %906 = vmatprep.subr.mxu0 0.0
    %907 = vmatpush1.msra.mxu0 %v812
    %908 = vmatprep.subr.mxu0 0.0
    %909 = vmatpush1.msra.mxu0 %v809
    %910 = vmatprep.subr.mxu0 0.0
    %911 = vmatpush1.msra.mxu0 %v806
    %912 = vmatprep.subr.mxu0 0.0
    %913 = vmatpush1.msra.mxu0 %v803
    %914 = vmatprep.subr.mxu0 0.0
    %915 = vmatpush1.msra.mxu0 %v800
    %916 = vmatprep.subr.mxu0 0.0
    %917 = vmatpush1.msra.mxu0 %v797
    %918 = vmatprep.subr.mxu0 0.0
    %919 = vmatpush1.msra.mxu0 %v794
    %920 = vmatprep.subr.mxu0 0.0
    %921 = vmatpush1.msra.mxu0 %v791
    %922 = vmatprep.subr.mxu0 0.0
    %923 = vmatpush1.msra.mxu0 %v788
    %924 = vmatprep.subr.mxu0 0.0
    %925 = vmatpush1.msra.mxu0 %v785
    %926 = vmatprep.subr.mxu0 0.0
    %927 = vmatpush1.msra.mxu0 %v782
    %928 = vmatprep.subr.mxu0 0.0
    %929 = vmatpush1.msra.mxu0 %v779
    %930 = vmatprep.subr.mxu0 0.0
    %931 = vmatpush1.msra.mxu0 %v776
    %932 = vmatprep.subr.mxu0 0.0
    %933 = vmatpush1.msra.mxu0 %v773
    %934 = vmatprep.subr.mxu0 0.0
    %935 = vmatpush1.msra.mxu0 %v770
    %936 = vmatprep.subr.mxu0 0.0
    %937 = vmatpush2.msra.mxu0 0.0
    %938 = vmatprep.subr.mxu0 0.0
    %939 = vmatpush2.msra.mxu0 0.0
    %940 = vmatprep.subr.mxu0 0.0
    %941 = vmatpush2.msra.mxu0 0.0
    %942 = vmatprep.subr.mxu0 0.0
    %943 = vmatpush2.msra.mxu0 0.0
    %944 = vmatprep.subr.mxu0 0.0
    %945 = vmatpush2.msra.mxu0 0.0
    %946 = vmatprep.subr.mxu0 0.0
    %947 = vmatpush2.msra.mxu0 0.0
    %948 = vmatprep.subr.mxu0 0.0
    %949 = vmatpush2.msra.mxu0 0.0
    %950 = vmatprep.subr.mxu0 0.0
    %951 = vmatpush2.msra.mxu0 0.0
    %952 = vmatprep.subr.mxu0 0.0
    %953 = vmatpush2.msra.mxu0 0.0
    %954 = vmatprep.subr.mxu0 0.0
    %955 = vmatpush2.msra.mxu0 0.0
    %956 = vmatprep.subr.mxu0 0.0
    %957 = vmatpush2.msra.mxu0 0.0
    %958 = vmatprep.subr.mxu0 0.0
    %959 = vmatpush2.msra.mxu0 0.0
    %960 = vmatprep.subr.mxu0 0.0
    %961 = vmatpush2.msra.mxu0 0.0
    %962 = vmatprep.subr.mxu0 0.0
    %963 = vmatpush2.msra.mxu0 0.0
    %964 = vmatprep.subr.mxu0 0.0
    %965 = vmatpush2.msra.mxu0 0.0
    %966 = vmatprep.subr.mxu0 0.0
    %967 = vmatpush2.msra.mxu0 0.0
    %968 = vmatprep.mubr.f32.mxu0 0.0
    %969 = vmatmul.mubr.f32.gmra.mxu0 %v764
    %v970 = vpop.f32.mrf.mxu0
    %v971 = vadd.f32 %v829, %v970
    %v972 = vpop.f32.mrf.mxu0
    %973 = vdwg.mxu0
    %v974 = vadd.f32 %v765, %v900
    %v975 = vadd.f32 %v766, %v902
    %v976 = vxor.u32 %v974, 2147483648
    %v977 = vxor.u32 %v975, 2147483648
    %v978 = vmul.f32 %v976, 1.442695
    %v979 = vpow.pop %v978
    %v980 = vmul.f32 %v977, 1.442695
    %v981 = vpow.pop %v980
    %v982 = vadd.f32 %v979, 1.0
    %v983 = vadd.f32 %v981, 1.0
    %v984 = vrcp.pop %v982
    %v985 = vmul.f32 1.0, %v984
    %v986 = vrcp.pop %v983
    %v987 = vmul.f32 1.0, %v986
    %v988 = vmul.f32 %v985, %v971
    %v989 = vadd.f32 %v767, %v988
    %v990 = vtanh.pop %v989
    %v991 = vsub.f32 1.0, %v987
    %v992 = vmul.f32 %v991, %v990
    %v993 = vmul.f32 %v987, %v764
    %v994 = vadd.f32 %v992, %v993
    %995 = vst [vmem:[#allocation3] sm:$0xff] %v994
    %996 = vst [vmem:[#allocation20] sm:$0xff] %v994
    %v997 = vld [vmem:[#allocation3] sm:$0xff]
    %v998 = vld [vmem:[#allocation16] sm:$0xff]
    %v999 = vld [vmem:[#allocation16 + $0x8] sm:$0xff]
    %v1000 = vld [vmem:[#allocation16 + $0x10] sm:$0xff]
    %v1001 = vld [vmem:[#allocation16 + $0x18] sm:$0xff]
    %v1002 = vld [vmem:[#allocation16 + $0x20] sm:$0xff]
    %v1003 = vld [vmem:[#allocation16 + $0x28] sm:$0xff]
    %v1004 = vld [vmem:[#allocation16 + $0x30] sm:$0xff]
    %v1005 = vld [vmem:[#allocation16 + $0x38] sm:$0xff]
    %v1006 = vld [vmem:[#allocation16 + $0x40] sm:$0xff]
    %v1007 = vld [vmem:[#allocation16 + $0x48] sm:$0xff]
    %v1008 = vld [vmem:[#allocation16 + $0x50] sm:$0xff]
    %v1009 = vld [vmem:[#allocation16 + $0x58] sm:$0xff]
    %v1010 = vld [vmem:[#allocation16 + $0x60] sm:$0xff]
    %v1011 = vld [vmem:[#allocation16 + $0x68] sm:$0xff]
    %v1012 = vld [vmem:[#allocation16 + $0x70] sm:$0xff]
    %v1013 = vld [vmem:[#allocation16 + $0x78] sm:$0xff]
    %v1014 = vld [vmem:[#allocation18] sm:$0x1]
    %v1016 = vlaneseq
    %v1017 = vshrl.u32 %v1016, 7
    %v1018 = vsub.s32 0, %v1017
    %v1019 = vrot.slane %v1014, %v1018
    %1021 = vmatprep.subr.mxu0 0.0
    %1022 = vmatpush1.msra.mxu0 %v1013
    %1023 = vmatprep.subr.mxu0 0.0
    %1024 = vmatpush1.msra.mxu0 %v1012
    %1025 = vmatprep.subr.mxu0 0.0
    %1026 = vmatpush1.msra.mxu0 %v1011
    %1027 = vmatprep.subr.mxu0 0.0
    %1028 = vmatpush1.msra.mxu0 %v1010
    %1029 = vmatprep.subr.mxu0 0.0
    %1030 = vmatpush1.msra.mxu0 %v1009
    %1031 = vmatprep.subr.mxu0 0.0
    %1032 = vmatpush1.msra.mxu0 %v1008
    %1033 = vmatprep.subr.mxu0 0.0
    %1034 = vmatpush1.msra.mxu0 %v1007
    %1035 = vmatprep.subr.mxu0 0.0
    %1036 = vmatpush1.msra.mxu0 %v1006
    %1037 = vmatprep.subr.mxu0 0.0
    %1038 = vmatpush1.msra.mxu0 %v1005
    %1039 = vmatprep.subr.mxu0 0.0
    %1040 = vmatpush1.msra.mxu0 %v1004
    %1041 = vmatprep.subr.mxu0 0.0
    %1042 = vmatpush1.msra.mxu0 %v1003
    %1043 = vmatprep.subr.mxu0 0.0
    %1044 = vmatpush1.msra.mxu0 %v1002
    %1045 = vmatprep.subr.mxu0 0.0
    %1046 = vmatpush1.msra.mxu0 %v1001
    %1047 = vmatprep.subr.mxu0 0.0
    %1048 = vmatpush1.msra.mxu0 %v1000
    %1049 = vmatprep.subr.mxu0 0.0
    %1050 = vmatpush1.msra.mxu0 %v999
    %1051 = vmatprep.subr.mxu0 0.0
    %1052 = vmatpush1.msra.mxu0 %v998
    %1053 = vmatprep.subr.mxu0 0.0
    %1054 = vmatpush2.msra.mxu0 0.0
    %1055 = vmatprep.subr.mxu0 0.0
    %1056 = vmatpush2.msra.mxu0 0.0
    %1057 = vmatprep.subr.mxu0 0.0
    %1058 = vmatpush2.msra.mxu0 0.0
    %1059 = vmatprep.subr.mxu0 0.0
    %1060 = vmatpush2.msra.mxu0 0.0
    %1061 = vmatprep.subr.mxu0 0.0
    %1062 = vmatpush2.msra.mxu0 0.0
    %1063 = vmatprep.subr.mxu0 0.0
    %1064 = vmatpush2.msra.mxu0 0.0
    %1065 = vmatprep.subr.mxu0 0.0
    %1066 = vmatpush2.msra.mxu0 0.0
    %1067 = vmatprep.subr.mxu0 0.0
    %1068 = vmatpush2.msra.mxu0 0.0
    %1069 = vmatprep.subr.mxu0 0.0
    %1070 = vmatpush2.msra.mxu0 0.0
    %1071 = vmatprep.subr.mxu0 0.0
    %1072 = vmatpush2.msra.mxu0 0.0
    %1073 = vmatprep.subr.mxu0 0.0
    %1074 = vmatpush2.msra.mxu0 0.0
    %1075 = vmatprep.subr.mxu0 0.0
    %1076 = vmatpush2.msra.mxu0 0.0
    %1077 = vmatprep.subr.mxu0 0.0
    %1078 = vmatpush2.msra.mxu0 0.0
    %1079 = vmatprep.subr.mxu0 0.0
    %1080 = vmatpush2.msra.mxu0 0.0
    %1081 = vmatprep.subr.mxu0 0.0
    %1082 = vmatpush2.msra.mxu0 0.0
    %1083 = vmatprep.subr.mxu0 0.0
    %1084 = vmatpush2.msra.mxu0 0.0
    %1085 = vmatprep.mubr.f32.mxu0 0.0
    %1086 = vmatmul.mubr.f32.gmra.mxu0 %v997
    %v1087 = vpop.f32.mrf.mxu0
    %v1088 = vadd.f32 %v1019, %v1087
    %v1089 = vpop.f32.mrf.mxu0
    %1090 = vdwg.mxu0
    %1091 = vst [vmem:[#allocation19] sm:$0xff] %v1088
    // Predicated region
    $region98: #{tpu_custom_call.1} parent=1 // pred_check
      _
    $region99: #{tpu_custom_call.1} parent=1 // pred_check_branch
      %1093 = sbr.rel (0) target = $region101
    $region100: #{tpu_custom_call.1} parent=1 // pred_region
      %s1095 = ssub.s32 128, 128
      %1096 = vsyncadd [#allocation6], %s1095
      %s1098 = sshll.u32 [#allocation19], 4
      %s1099 = int_to_ptr.vmem [resolvable:$true] %s1098
      %1101 = dma.vmem_to_hbm [thread:$0]  %s1099, 128, %s14, [#allocation6]
    $region101: #{tpu_custom_call.1} parent=1 // pred_fallthru
      _
    // Predicated region
    $region102: #{tpu_custom_call.1} parent=1 // pred_check
      _
    $region103: #{tpu_custom_call.1} parent=1 // pred_check_branch
      %1103 = sbr.rel (0) target = $region105
    $region104: #{tpu_custom_call.1} parent=1 // pred_region
      %s1105 = ssub.s32 128, 128
      %1106 = vsyncadd [#allocation21], %s1105
      %s1108 = sshll.u32 [#allocation20], 4
      %s1109 = int_to_ptr.vmem [resolvable:$true] %s1108
      %1111 = dma.vmem_to_hbm [thread:$0]  %s1109, 128, %s15, [#allocation21]
    $region105: #{tpu_custom_call.1} parent=1 // pred_fallthru
      _
    // Predicated region
    $region106: #{tpu_custom_call.1} parent=1 // pred_check
      _
    $region107: #{tpu_custom_call.1} parent=1 // pred_check_branch
      %1113 = sbr.rel (0) target = $region109
    $region108: #{tpu_custom_call.1} parent=1 // pred_region
      %1114 = dma.done [#allocation6], 128
    $region109: #{tpu_custom_call.1} parent=1 // pred_fallthru
      _
    // Predicated region
    $region110: #{tpu_custom_call.1} parent=1 // pred_check
      _
    $region111: #{tpu_custom_call.1} parent=1 // pred_check_branch
      %1116 = sbr.rel (0) target = $region113
    $region112: #{tpu_custom_call.1} parent=1 // pred_region
      %1117 = dma.done [#allocation21], 128
    $region113: #{tpu_custom_call.1} parent=1 // pred_fallthru
      _
    %1118 = vsyncpa [#allocation5], 1
    %1119 = vsyncpa [#allocation8], 1
    %1120 = vsyncpa [#allocation11], 1
    %1121 = vsyncpa [#allocation14], 1
    %1122 = vsyncpa [#allocation17], 1
    %1123 = vsyncpa [#allocation6], 1
    %1124 = vsyncpa [#allocation21], 1

</llo_original>
